<compile_context>
chip_gen: v7x
topology: tpu7x:2x2x1
jax: 0.10.0
libtpu: 0.0.40
codegen_flags: <defaults>
</compile_context>

<pallas_src>
import jax
import jax.numpy as jnp
from jax import lax
from jax.experimental import pallas as pl
from jax.experimental.pallas import tpu as pltpu

LANE = 128          # vreg lane width: feature dims padded to a multiple of this
ROW_GRANULE = 256   # MXU granule on v6e/v7x (multiple of v5e's 128): pad N to this


def _round_up(x, m):
    return ((x + m - 1) // m) * m


# ---------------------------------------------------------------------------
# Fused kernel: MLP + propagation; A DMA'd manually and overlapped with MLP
# ---------------------------------------------------------------------------

def _make_appnp_kernel(num_trans_layers, num_prop_layers):
    """Build the fused kernel for a static (layer count, prop-step count)."""

    def kernel(alpha_ref, a_hbm_ref, x_ref, *rest):
        # rest = (w0, b0, ..., w_{L-1}, b_{L-1}, o_ref, a_vmem, a_sem)
        o_ref, a_vmem, a_sem = rest[-3], rest[-2], rest[-1]
        wb = rest[:-3]
        alpha = alpha_ref[0]

        # Kick off A's HBM->VMEM DMA now; it is hidden behind the MLP compute.
        a_copy = pltpu.make_async_copy(a_hbm_ref, a_vmem, a_sem)
        a_copy.start()

        # ---- transformation MLP (bf16 operands, f32 accumulation) ----------
        h = x_ref[...]                                      # bf16 [n_p, fin_p]
        for i in range(num_trans_layers - 1):
            w = wb[2 * i][...]                              # bf16
            b = wb[2 * i + 1][...]                          # f32
            h = jnp.dot(h, w, preferred_element_type=jnp.float32) + b
            h = jnp.maximum(h, 0.0).astype(jnp.bfloat16)
            # dropout: identity in eval mode

        w_last = wb[2 * (num_trans_layers - 1)][...]        # bf16, slab cols
        b_last = wb[2 * (num_trans_layers - 1) + 1][...]    # f32,  slab cols
        h_local = jnp.dot(h, w_last, preferred_element_type=jnp.float32) + b_last

        teleport = alpha * h_local   # hoisted: computed once, reused each step

        # ---- propagation: H <- A @ H + alpha * H_local, repeated -----------
        a_copy.wait()
        a = a_vmem[...]                                     # bf16 [n_p, n_p]

        def prop_body(_, h_cur):
            return jnp.dot(a, h_cur.astype(jnp.bfloat16),
                           preferred_element_type=jnp.float32) + teleport

        h_out = lax.fori_loop(0, num_prop_layers, prop_body, h_local,
                              unroll=True)
        o_ref[...] = h_out.astype(o_ref.dtype)

    return kernel


# ---------------------------------------------------------------------------
# Wrapper: pad to MXU-aligned shapes, single pallas_call, slice back
# ---------------------------------------------------------------------------

def appnp_forward(params, A, X, *, num_prop_layers, alpha):
    """params: list of (W [fin, fout], b [1, fout]); A: [N, N]; X: [N, F_in]."""
    n = A.shape[0]
    num_layers = len(params)
    fin = X.shape[1]

    n_p = _round_up(n, ROW_GRANULE)
    fin_p = _round_up(fin, LANE)

    # Zero padding: feature dims to 128 lanes, rows to the MXU granule.
    # Padded feature columns stay exactly zero through matmul/bias/relu/prop;
    # A's padded rows AND columns are zero so padded rows (which pick up
    # relu(bias) values) never contaminate real rows; output is sliced back.
    x_p = jnp.zeros((n_p, fin_p), jnp.bfloat16).at[:n, :fin].set(
        X.astype(jnp.bfloat16))
    a_p = jnp.zeros((n_p, n_p), jnp.bfloat16).at[:n, :n].set(
        A.astype(jnp.bfloat16))

    padded_params = []
    in_p = fin_p
    for (w, b) in params:
        fi, fo = w.shape
        fo_p = _round_up(fo, LANE)
        w_p = jnp.zeros((in_p, fo_p), jnp.bfloat16).at[:fi, :fo].set(
            w.astype(jnp.bfloat16))
        b_p = jnp.zeros((1, fo_p), jnp.float32).at[:, :fo].set(b)
        padded_params.append((w_p, b_p))
        in_p = fo_p

    fout = params[-1][0].shape[1]
    fout_p = _round_up(fout, LANE)

    # Output-column slabs propagate independently -> "parallel" grid axis
    # (uses both v7x TensorCores when there are >= 2 slabs).
    if fout_p >= 512 and fout_p % 256 == 0:
        slab = 256
    elif fout_p >= 256:
        slab = 128
    else:
        slab = fout_p
    num_slabs = fout_p // slab

    kernel = _make_appnp_kernel(num_layers, num_prop_layers)

    def full2d(shape):
        return pl.BlockSpec(shape, lambda s: (0, 0))

    in_specs = [
        pl.BlockSpec(memory_space=pltpu.MemorySpace.SMEM),  # alpha scalar
        pl.BlockSpec(memory_space=pl.ANY),                  # A: stays in HBM
        full2d((n_p, fin_p)),                               # X (padded)
    ]
    args = [jnp.asarray([alpha], jnp.float32), a_p, x_p]
    for li, (w_p, b_p) in enumerate(padded_params):
        if li == num_layers - 1:
            # Last layer produces the output slab: slice its columns per slab.
            in_specs.append(pl.BlockSpec((w_p.shape[0], slab),
                                         lambda s: (0, s)))
            in_specs.append(pl.BlockSpec((1, slab), lambda s: (0, s)))
        else:
            in_specs.append(full2d(w_p.shape))
            in_specs.append(full2d(b_p.shape))
        args.append(w_p)
        args.append(b_p)

    out_spec = pl.BlockSpec((n_p, slab), lambda s: (0, s))

    # Scoped-VMEM budget: A scratch (bf16) + double-buffered inputs + output
    # + live f32 activations, capped at v7x's 64 MiB physical VMEM.
    hidden_p = max(w.shape[0] for (w, _) in padded_params)
    est = (
        2 * n_p * n_p
        + 2 * (x_p.size * 2
               + sum(w.size * 2 + b.size * 4 for (w, b) in padded_params))
        + 2 * n_p * slab * 4
        + 4 * n_p * (hidden_p + 4 * slab)
    )
    vmem_limit = int(min(64 << 20, max(32 << 20, 2 * est)))

    # Advisory cost estimate so XLA schedules the pad/slice around the call.
    mlp_flops = 0
    prev = fin_p
    for (w_p, _) in padded_params:
        mlp_flops += 2 * n_p * prev * w_p.shape[1]
        prev = w_p.shape[1]
    prop_flops = num_prop_layers * 2 * n_p * n_p * fout_p
    bytes_accessed = (
        int(a_p.size) * 2 * num_slabs + int(x_p.size) * 2
        + sum(int(w.size) * 2 + int(b.size) * 4 for (w, b) in padded_params)
        + n_p * fout_p * 4
    )
    cost = pl.CostEstimate(flops=int(num_slabs * mlp_flops + prop_flops),
                           transcendentals=0,
                           bytes_accessed=int(bytes_accessed))

    out_p = pl.pallas_call(
        kernel,
        out_shape=jax.ShapeDtypeStruct((n_p, fout_p), jnp.float32),
        grid=(num_slabs,),
        in_specs=in_specs,
        out_specs=out_spec,
        scratch_shapes=[
            pltpu.VMEM((n_p, n_p), jnp.bfloat16),   # resident copy of A
            pltpu.SemaphoreType.DMA,                # completion sem for A DMA
        ],
        compiler_params=pltpu.CompilerParams(
            dimension_semantics=("parallel",),
            vmem_limit_bytes=vmem_limit),
        cost_estimate=cost,
    )(*args)

    return out_p[:n, :fout]


# ---------------------------------------------------------------------------
# Parameter init (matches PyTorch nn.Linear default init, stored as [in, out])
# ---------------------------------------------------------------------------

def init_appnp_params(key, in_size, out_size, num_trans_layers, hidden_size):
    assert num_trans_layers >= 2
    sizes = [in_size] + [hidden_size] * (num_trans_layers - 1) + [out_size]
    params = []
    for i in range(num_trans_layers):
        key, kw, kb = jax.random.split(key, 3)
        fan_in, fan_out = sizes[i], sizes[i + 1]
        bound = 1.0 / jnp.sqrt(fan_in)
        w = jax.random.uniform(kw, (fan_in, fan_out), jnp.float32, -bound, bound)
        b = jax.random.uniform(kb, (1, fan_out), jnp.float32, -bound, bound)
        params.append((w, b))
    return params


# ---------------------------------------------------------------------------
# Pure-JAX f32 reference for correctness checking
# ---------------------------------------------------------------------------

def appnp_reference(params, A, X, *, num_prop_layers, alpha):
    h = X
    for (w, b) in params[:-1]:
        h = jnp.maximum(h @ w + b, 0.0)
    w_last, b_last = params[-1]
    h_local = h @ w_last + b_last
    h_out = h_local
    for _ in range(num_prop_layers):
        h_out = A @ h_out + alpha * h_local
    return h_out


# ---------------------------------------------------------------------------

if __name__ == "__main__":
    # Small, TPU-friendly shapes
    N = 64            # number of graph nodes
    IN_SIZE = 16
    HIDDEN = 32
    OUT_SIZE = 8
    NUM_TRANS_LAYERS = 3
    NUM_PROP_LAYERS = 4
    ALPHA = 0.1
    DROPOUT = 0.5     # eval mode -> identity

    key = jax.random.PRNGKey(0)
    kA, kX, kP = jax.random.split(key, 3)

    # Row-normalized dense adjacency (with self loops) and node features.
    adj_raw = (jax.random.uniform(kA, (N, N)) < 0.1).astype(jnp.float32)
    adj_raw = adj_raw + jnp.eye(N, dtype=jnp.float32)
    A = adj_raw / jnp.sum(adj_raw, axis=1, keepdims=True)
    X = jax.random.normal(kX, (N, IN_SIZE), dtype=jnp.float32)

    params = init_appnp_params(kP, IN_SIZE, OUT_SIZE, NUM_TRANS_LAYERS, HIDDEN)

    out = appnp_forward(params, A, X,
                        num_prop_layers=NUM_PROP_LAYERS, alpha=ALPHA)
    out = jax.block_until_ready(out)

    ref = appnp_reference(params, A, X,
                          num_prop_layers=NUM_PROP_LAYERS, alpha=ALPHA)
    assert out.shape == (N, OUT_SIZE)
    # bf16 operands (f32 accumulation) -> relaxed tolerance vs the f32 reference
    assert jnp.allclose(out, ref, atol=3e-2, rtol=3e-2), "mismatch vs reference"

    print("KERNEL_OK")
</pallas_src>

<mosaic_0001>
module attributes {stable_mosaic.version = 11 : i64} {
  func.func @kernel(%arg0: i32, %arg1: memref<1xf32, #tpu.memory_space<smem>>, %arg2: memref<256x256xbf16, #tpu.memory_space<any>>, %arg3: memref<256x128xbf16, #tpu.memory_space<vmem>>, %arg4: memref<128x128xbf16, #tpu.memory_space<vmem>>, %arg5: memref<1x128xf32, #tpu.memory_space<vmem>>, %arg6: memref<128x128xbf16, #tpu.memory_space<vmem>>, %arg7: memref<1x128xf32, #tpu.memory_space<vmem>>, %arg8: memref<128x128xbf16, #tpu.memory_space<vmem>>, %arg9: memref<1x128xf32, #tpu.memory_space<vmem>>, %arg10: memref<256x128xf32, #tpu.memory_space<vmem>>, %arg11: memref<256x256xbf16, #tpu.memory_space<vmem>>, %arg12: memref<!tpu.dma_semaphore, #tpu.memory_space<semaphore_mem>>) attributes {dimension_semantics = [#tpu.dimension_semantics<parallel>], iteration_bounds = array<i64: 1>, scalar_prefetch = 0 : i64, scratch_operands = 2 : i64, tpu.core_type = #tpu.core_type<tc>, window_params = [{transform_indices = @transform_0, window_bounds = array<i64: 1>}, {}, {pipeline_mode = #tpu.pipeline_mode<synchronous>, transform_indices = @transform_2, window_bounds = array<i64: 256, 128>}, {pipeline_mode = #tpu.pipeline_mode<synchronous>, transform_indices = @transform_3, window_bounds = array<i64: 128, 128>}, {pipeline_mode = #tpu.pipeline_mode<synchronous>, transform_indices = @transform_4, window_bounds = array<i64: 1, 128>}, {pipeline_mode = #tpu.pipeline_mode<synchronous>, transform_indices = @transform_5, window_bounds = array<i64: 128, 128>}, {pipeline_mode = #tpu.pipeline_mode<synchronous>, transform_indices = @transform_6, window_bounds = array<i64: 1, 128>}, {transform_indices = @transform_7, window_bounds = array<i64: 128, 128>}, {transform_indices = @transform_8, window_bounds = array<i64: 1, 128>}, {transform_indices = @transform_9, window_bounds = array<i64: 256, 128>}]} {
    %c0 = arith.constant 0 : index
    %0 = memref.load %arg1[%c0] : memref<1xf32, #tpu.memory_space<smem>>
    tpu.enqueue_dma source(%arg2 : memref<256x256xbf16, #tpu.memory_space<any>>) target(%arg11 : memref<256x256xbf16, #tpu.memory_space<vmem>>) target_semaphore(%arg12 : memref<!tpu.dma_semaphore, #tpu.memory_space<semaphore_mem>>)
    %c0_0 = arith.constant 0 : index
    %c0_1 = arith.constant 0 : index
    %1 = vector.load %arg3[%c0_0, %c0_1] : memref<256x128xbf16, #tpu.memory_space<vmem>>, vector<256x128xbf16>
    %c0_2 = arith.constant 0 : index
    %c0_3 = arith.constant 0 : index
    %2 = vector.load %arg4[%c0_2, %c0_3] : memref<128x128xbf16, #tpu.memory_space<vmem>>, vector<128x128xbf16>
    %c0_4 = arith.constant 0 : index
    %c0_5 = arith.constant 0 : index
    %3 = vector.load %arg5[%c0_4, %c0_5] : memref<1x128xf32, #tpu.memory_space<vmem>>, vector<1x128xf32>
    %cst = arith.constant dense<0.000000e+00> : vector<256x128xf32>
    %4 = tpu.matmul %1, %2, %cst {dimension_numbers = #tpu.dot_dimension_numbers<[1], [0], [0], [1], [0, 0, 1, 1], [], []>} : vector<256x128xbf16>, vector<128x128xbf16>, vector<256x128xf32> -> vector<256x128xf32>
    %5 = vector.broadcast %3 : vector<1x128xf32> to vector<256x128xf32>
    %6 = arith.addf %4, %5 : vector<256x128xf32>
    %cst_6 = arith.constant 0.000000e+00 : f32
    %7 = vector.broadcast %cst_6 : f32 to vector<256x128xf32>
    %8 = arith.maximumf %6, %7 : vector<256x128xf32>
    %9 = arith.truncf %8 : vector<256x128xf32> to vector<256x128xbf16>
    %c0_7 = arith.constant 0 : index
    %c0_8 = arith.constant 0 : index
    %10 = vector.load %arg6[%c0_7, %c0_8] : memref<128x128xbf16, #tpu.memory_space<vmem>>, vector<128x128xbf16>
    %c0_9 = arith.constant 0 : index
    %c0_10 = arith.constant 0 : index
    %11 = vector.load %arg7[%c0_9, %c0_10] : memref<1x128xf32, #tpu.memory_space<vmem>>, vector<1x128xf32>
    %cst_11 = arith.constant dense<0.000000e+00> : vector<256x128xf32>
    %12 = tpu.matmul %9, %10, %cst_11 {dimension_numbers = #tpu.dot_dimension_numbers<[1], [0], [0], [1], [0, 0, 1, 1], [], []>} : vector<256x128xbf16>, vector<128x128xbf16>, vector<256x128xf32> -> vector<256x128xf32>
    %13 = vector.broadcast %11 : vector<1x128xf32> to vector<256x128xf32>
    %14 = arith.addf %12, %13 : vector<256x128xf32>
    %cst_12 = arith.constant 0.000000e+00 : f32
    %15 = vector.broadcast %cst_12 : f32 to vector<256x128xf32>
    %16 = arith.maximumf %14, %15 : vector<256x128xf32>
    %17 = arith.truncf %16 : vector<256x128xf32> to vector<256x128xbf16>
    %c0_13 = arith.constant 0 : index
    %c0_14 = arith.constant 0 : index
    %18 = vector.load %arg8[%c0_13, %c0_14] : memref<128x128xbf16, #tpu.memory_space<vmem>>, vector<128x128xbf16>
    %c0_15 = arith.constant 0 : index
    %c0_16 = arith.constant 0 : index
    %19 = vector.load %arg9[%c0_15, %c0_16] : memref<1x128xf32, #tpu.memory_space<vmem>>, vector<1x128xf32>
    %cst_17 = arith.constant dense<0.000000e+00> : vector<256x128xf32>
    %20 = tpu.matmul %17, %18, %cst_17 {dimension_numbers = #tpu.dot_dimension_numbers<[1], [0], [0], [1], [0, 0, 1, 1], [], []>} : vector<256x128xbf16>, vector<128x128xbf16>, vector<256x128xf32> -> vector<256x128xf32>
    %21 = vector.broadcast %19 : vector<1x128xf32> to vector<256x128xf32>
    %22 = arith.addf %20, %21 : vector<256x128xf32>
    %23 = vector.broadcast %0 : f32 to vector<256x128xf32>
    %24 = arith.mulf %23, %22 : vector<256x128xf32>
    tpu.wait_dma2 semaphore(%arg12 : memref<!tpu.dma_semaphore, #tpu.memory_space<semaphore_mem>>) src(%arg2 : memref<256x256xbf16, #tpu.memory_space<any>>) dst(%arg11 : memref<256x256xbf16, #tpu.memory_space<vmem>>)
    %c0_18 = arith.constant 0 : index
    %c0_19 = arith.constant 0 : index
    %25 = vector.load %arg11[%c0_18, %c0_19] : memref<256x256xbf16, #tpu.memory_space<vmem>>, vector<256x256xbf16>
    %c0_i32 = arith.constant 0 : i32
    %26 = arith.truncf %22 : vector<256x128xf32> to vector<256x128xbf16>
    %cst_20 = arith.constant dense<0.000000e+00> : vector<256x128xf32>
    %27 = tpu.matmul %25, %26, %cst_20 {dimension_numbers = #tpu.dot_dimension_numbers<[1], [0], [0], [1], [0, 0, 1, 1], [], []>} : vector<256x256xbf16>, vector<256x128xbf16>, vector<256x128xf32> -> vector<256x128xf32>
    %28 = arith.addf %27, %24 : vector<256x128xf32>
    %c1_i32 = arith.constant 1 : i32
    %29 = arith.truncf %28 : vector<256x128xf32> to vector<256x128xbf16>
    %cst_21 = arith.constant dense<0.000000e+00> : vector<256x128xf32>
    %30 = tpu.matmul %25, %29, %cst_21 {dimension_numbers = #tpu.dot_dimension_numbers<[1], [0], [0], [1], [0, 0, 1, 1], [], []>} : vector<256x256xbf16>, vector<256x128xbf16>, vector<256x128xf32> -> vector<256x128xf32>
    %31 = arith.addf %30, %24 : vector<256x128xf32>
    %c2_i32 = arith.constant 2 : i32
    %32 = arith.truncf %31 : vector<256x128xf32> to vector<256x128xbf16>
    %cst_22 = arith.constant dense<0.000000e+00> : vector<256x128xf32>
    %33 = tpu.matmul %25, %32, %cst_22 {dimension_numbers = #tpu.dot_dimension_numbers<[1], [0], [0], [1], [0, 0, 1, 1], [], []>} : vector<256x256xbf16>, vector<256x128xbf16>, vector<256x128xf32> -> vector<256x128xf32>
    %34 = arith.addf %33, %24 : vector<256x128xf32>
    %c3_i32 = arith.constant 3 : i32
    %35 = arith.truncf %34 : vector<256x128xf32> to vector<256x128xbf16>
    %cst_23 = arith.constant dense<0.000000e+00> : vector<256x128xf32>
    %36 = tpu.matmul %25, %35, %cst_23 {dimension_numbers = #tpu.dot_dimension_numbers<[1], [0], [0], [1], [0, 0, 1, 1], [], []>} : vector<256x256xbf16>, vector<256x128xbf16>, vector<256x128xf32> -> vector<256x128xf32>
    %37 = arith.addf %36, %24 : vector<256x128xf32>
    %c0_24 = arith.constant 0 : index
    %c0_25 = arith.constant 0 : index
    %38 = vector.load %arg10[%c0_24, %c0_25] : memref<256x128xf32, #tpu.memory_space<vmem>>, vector<256x128xf32>
    tpu.vector_store %arg10[%c0_24, %c0_25], %37 {strides = array<i32>} : memref<256x128xf32, #tpu.memory_space<vmem>>, vector<256x128xf32>,
    return
  }
  func.func @transform_0(%arg0: i32) -> i32 {
    %c0_i32 = arith.constant 0 : i32
    %c0_i32_0 = arith.constant 0 : i32
    return %c0_i32 : i32
  }
  func.func @transform_2(%arg0: i32) -> (i32, i32) {
    %c0_i32 = arith.constant 0 : i32
    %c0_i32_0 = arith.constant 0 : i32
    %c0_i32_1 = arith.constant 0 : i32
    return %c0_i32, %c0_i32_0 : i32, i32
  }
  func.func @transform_3(%arg0: i32) -> (i32, i32) {
    %c0_i32 = arith.constant 0 : i32
    %c0_i32_0 = arith.constant 0 : i32
    %c0_i32_1 = arith.constant 0 : i32
    return %c0_i32, %c0_i32_0 : i32, i32
  }
  func.func @transform_4(%arg0: i32) -> (i32, i32) {
    %c0_i32 = arith.constant 0 : i32
    %c0_i32_0 = arith.constant 0 : i32
    %c0_i32_1 = arith.constant 0 : i32
    return %c0_i32, %c0_i32_0 : i32, i32
  }
  func.func @transform_5(%arg0: i32) -> (i32, i32) {
    %c0_i32 = arith.constant 0 : i32
    %c0_i32_0 = arith.constant 0 : i32
    %c0_i32_1 = arith.constant 0 : i32
    return %c0_i32, %c0_i32_0 : i32, i32
  }
  func.func @transform_6(%arg0: i32) -> (i32, i32) {
    %c0_i32 = arith.constant 0 : i32
    %c0_i32_0 = arith.constant 0 : i32
    %c0_i32_1 = arith.constant 0 : i32
    return %c0_i32, %c0_i32_0 : i32, i32
  }
  func.func @transform_7(%arg0: i32) -> (i32, i32) {
    %c0_i32 = arith.constant 0 : i32
    %c0_i32_0 = arith.constant 0 : i32
    return %c0_i32, %arg0 : i32, i32
  }
  func.func @transform_8(%arg0: i32) -> (i32, i32) {
    %c0_i32 = arith.constant 0 : i32
    %c0_i32_0 = arith.constant 0 : i32
    return %c0_i32, %arg0 : i32, i32
  }
  func.func @transform_9(%arg0: i32) -> (i32, i32) {
    %c0_i32 = arith.constant 0 : i32
    %c0_i32_0 = arith.constant 0 : i32
    return %c0_i32, %arg0 : i32, i32
  }
}

</mosaic_0001>

<llo_original>
// kernel: tpu_custom_call.1
$region0: #{tpu_custom_call.1}
  #allocation0 [shape = 'u32[]', space=smem, size = 0x4, offset = 0x4, fixed_abs, tag = 'smem constant byte address 0x4 - core index']
  #allocation1 [shape = 'u32[144,128]{1,0:T(1,128)}', space=vmem, size = 0x12000, scoped, tag = 'internal scratch']
  #allocation2 [shape = 'bf16[256,256]{1,0:T(16,128)(2,1)}', space=vmem, size = 0x20000, scoped, tag = 'scratch operand']
  #allocation3 [shape = 's32[1]{0}', space=sflag, size = 0x4, scoped, tag = 'scratch operand']
  #allocation4 [shape = 'f32[1]{0:T(128)S(6)}', space=smem, size = 0x200, scoped, tag = 'scoped memory for tpu_custom_call.1']
  #allocation14 [shape = 's32[]', space=sflag, size = 0x4, offset = 0, fixed_abs, tag = 'sflag constant byte address 0x0 - dummy sync flag']
  %s0 = inlined_call_operand.<no memory space> [shape: f32[1], index: 0, kind: input, shape index: {}]
  %s1 = inlined_call_operand.hbm [shape: bf16[256,256], index: 1, kind: input, shape index: {}]
  %s2 = inlined_call_operand.hbm [shape: bf16[256,128], index: 2, kind: input, shape index: {}]
  %s3 = inlined_call_operand.hbm [shape: bf16[128,128], index: 3, kind: input, shape index: {}]
  %s4 = inlined_call_operand.vmem [shape: f32[1,128], index: 4, kind: input, shape index: {}]
  %s5 = inlined_call_operand.hbm [shape: bf16[128,128], index: 5, kind: input, shape index: {}]
  %s6 = inlined_call_operand.vmem [shape: f32[1,128], index: 6, kind: input, shape index: {}]
  %s7 = inlined_call_operand.hbm [shape: bf16[128,128], index: 7, kind: input, shape index: {}]
  %s8 = inlined_call_operand.vmem [shape: f32[1,128], index: 8, kind: input, shape index: {}]
  %s9 = inlined_call_operand.hbm [shape: f32[256,128], index: 9, kind: output, shape index: {}]
  %s10 = sld [smem:[#allocation0]]
  $region58: #{tpu_custom_call.1} parent=0
    _
  %s12 = ssub.s32 1, %s10
  %s13 = scalar_select 0, %s12, %s10
  %14 = sst [smem:[#allocation4]] %s0
  $region1: #{tpu_custom_call.1} parent=0
    #allocation5 [shape = 'u8[65536]{0}', space=vmem, size = 0x10000, scoped, tag = 'input window, operand 2, single buffered']
    #allocation6 [shape = 's32[1]{0}', space=sflag, size = 0x4, scoped, tag = 'scoped memory for tpu_custom_call.1']
    #allocation7 [shape = 's32[1]{0}', space=sflag, size = 0x4, scoped, tag = 'scoped memory for tpu_custom_call.1']
    #allocation8 [shape = 'u8[32768]{0}', space=vmem, size = 0x8000, scoped, tag = 'input window, operand 3, single buffered']
    #allocation9 [shape = 's32[1]{0}', space=sflag, size = 0x4, scoped, tag = 'scoped memory for tpu_custom_call.1']
    #allocation10 [shape = 'u8[32768]{0}', space=vmem, size = 0x8000, scoped, tag = 'input window, operand 5, single buffered']
    #allocation11 [shape = 'u8[32768]{0}', space=vmem, size = 0x8000, scoped, tag = 'input window, operand 7, single buffered']
    #allocation12 [shape = 's32[1]{0}', space=sflag, size = 0x4, scoped, tag = 'scoped memory for tpu_custom_call.1']
    #allocation13 [shape = 'u8[131072]{0}', space=vmem, size = 0x20000, scoped, tag = 'output window, operand 0, single buffered']
    #allocation15 [shape = 'u32[9]{0}', space=smem, size = 0x24, scoped, tag = 'DMA stride descriptor']
    %15 = vsyncpa [#allocation6], 0
    %16 = vsyncpa [#allocation9], 0
    %17 = vsyncpa [#allocation12], 0
    %18 = vsyncpa [#allocation7], 0
    // Predicated region
    $region2: #{tpu_custom_call.1} parent=1 // pred_check
      _
    $region3: #{tpu_custom_call.1} parent=1 // pred_check_branch
      %20 = sbr.rel (0) target = $region5
    $region4: #{tpu_custom_call.1} parent=1 // pred_region
      _
    $region5: #{tpu_custom_call.1} parent=1 // pred_fallthru
      _
    // Predicated region
    $region6: #{tpu_custom_call.1} parent=1 // pred_check
      _
    $region7: #{tpu_custom_call.1} parent=1 // pred_check_branch
      %22 = sbr.rel (0) target = $region9
    $region8: #{tpu_custom_call.1} parent=1 // pred_region
      %s24 = ssub.s32 2048, 2048
      %25 = vsyncadd [#allocation6], %s24
      %s26 = sshll.u32 [#allocation5], 4
      %s27 = int_to_ptr.vmem [resolvable:$true] %s26
      %32 = dma.hbm_to_vmem [thread:$0]  %s2, 2048, %s27, [#allocation6], 64, 64, 4
    $region9: #{tpu_custom_call.1} parent=1 // pred_fallthru
      _
    // Predicated region
    $region10: #{tpu_custom_call.1} parent=1 // pred_check
      _
    $region11: #{tpu_custom_call.1} parent=1 // pred_check_branch
      %34 = sbr.rel (0) target = $region13
    $region12: #{tpu_custom_call.1} parent=1 // pred_region
      %s36 = ssub.s32 1024, 1024
      %37 = vsyncadd [#allocation9], %s36
      %s38 = sshll.u32 [#allocation8], 4
      %s39 = int_to_ptr.vmem [resolvable:$true] %s38
      %44 = dma.hbm_to_vmem [thread:$0]  %s3, 1024, %s39, [#allocation9], 64, 64, 4
    $region13: #{tpu_custom_call.1} parent=1 // pred_fallthru
      _
    // Predicated region
    $region14: #{tpu_custom_call.1} parent=1 // pred_check
      _
    $region15: #{tpu_custom_call.1} parent=1 // pred_check_branch
      %46 = sbr.rel (0) target = $region17
    $region16: #{tpu_custom_call.1} parent=1 // pred_region
      _
    $region17: #{tpu_custom_call.1} parent=1 // pred_fallthru
      _
    // Predicated region
    $region18: #{tpu_custom_call.1} parent=1 // pred_check
      _
    $region19: #{tpu_custom_call.1} parent=1 // pred_check_branch
      %48 = sbr.rel (0) target = $region21
    $region20: #{tpu_custom_call.1} parent=1 // pred_region
      %s50 = ssub.s32 1024, 1024
      %51 = vsyncadd [#allocation9], %s50
      %s52 = sshll.u32 [#allocation10], 4
      %s53 = int_to_ptr.vmem [resolvable:$true] %s52
      %58 = dma.hbm_to_vmem [thread:$0]  %s5, 1024, %s53, [#allocation9], 64, 64, 4
    $region21: #{tpu_custom_call.1} parent=1 // pred_fallthru
      _
    // Predicated region
    $region22: #{tpu_custom_call.1} parent=1 // pred_check
      _
    $region23: #{tpu_custom_call.1} parent=1 // pred_check_branch
      %60 = sbr.rel (0) target = $region25
    $region24: #{tpu_custom_call.1} parent=1 // pred_region
      _
    $region25: #{tpu_custom_call.1} parent=1 // pred_fallthru
      _
    // Predicated region
    $region26: #{tpu_custom_call.1} parent=1 // pred_check
      _
    $region27: #{tpu_custom_call.1} parent=1 // pred_check_branch
      %62 = sbr.rel (0) target = $region29
    $region28: #{tpu_custom_call.1} parent=1 // pred_region
      %s64 = ssub.s32 1024, 1024
      %65 = vsyncadd [#allocation12], %s64
      %s66 = sshll.u32 [#allocation11], 4
      %s67 = int_to_ptr.vmem [resolvable:$true] %s66
      %72 = dma.hbm_to_vmem [thread:$0]  %s7, 1024, %s67, [#allocation12], 64, 64, 4
    $region29: #{tpu_custom_call.1} parent=1 // pred_fallthru
      _
    // Predicated region
    $region30: #{tpu_custom_call.1} parent=1 // pred_check
      _
    $region31: #{tpu_custom_call.1} parent=1 // pred_check_branch
      %74 = sbr.rel (0) target = $region33
    $region32: #{tpu_custom_call.1} parent=1 // pred_region
      _
    $region33: #{tpu_custom_call.1} parent=1 // pred_fallthru
      _
    // Predicated region
    $region34: #{tpu_custom_call.1} parent=1 // pred_check
      _
    $region35: #{tpu_custom_call.1} parent=1 // pred_check_branch
      %76 = sbr.rel (0) target = $region37
    $region36: #{tpu_custom_call.1} parent=1 // pred_region
      %77 = dma.done [#allocation6], 2048
    $region37: #{tpu_custom_call.1} parent=1 // pred_fallthru
      _
    // Predicated region
    $region38: #{tpu_custom_call.1} parent=1 // pred_check
      _
    $region39: #{tpu_custom_call.1} parent=1 // pred_check_branch
      %79 = sbr.rel (0) target = $region41
    $region40: #{tpu_custom_call.1} parent=1 // pred_region
      %80 = dma.done [#allocation9], 1024
    $region41: #{tpu_custom_call.1} parent=1 // pred_fallthru
      _
    // Predicated region
    $region42: #{tpu_custom_call.1} parent=1 // pred_check
      _
    $region43: #{tpu_custom_call.1} parent=1 // pred_check_branch
      %82 = sbr.rel (0) target = $region45
    $region44: #{tpu_custom_call.1} parent=1 // pred_region
      %83 = dma.done [#allocation9], 1024
    $region45: #{tpu_custom_call.1} parent=1 // pred_fallthru
      _
    // Predicated region
    $region46: #{tpu_custom_call.1} parent=1 // pred_check
      _
    $region47: #{tpu_custom_call.1} parent=1 // pred_check_branch
      %85 = sbr.rel (0) target = $region49
    $region48: #{tpu_custom_call.1} parent=1 // pred_region
      %86 = dma.done [#allocation12], 1024
    $region49: #{tpu_custom_call.1} parent=1 // pred_fallthru
      _
    %s88 = sld [smem:[#allocation4]]
    %s90 = sshll.u32 1, 14
    %s91 = sxor.u32 4294967295, %s90
    %s93 = sld [smem:[#allocation0]]
    %s94 = sadd.s32 2, %s93
    %s96 = sshll.u32 7, 26
    %s97 = sxor.u32 4294967295, %s96
    %s98 = sand.u32 0, %s97
    %s99 = sshll.u32 %s94, 26
    %s100 = sor.u32 %s98, %s99
    %s101 = sshll.u32 [#allocation2], 4
    %s102 = int_to_ptr.vmem [resolvable:$true] %s101
    %105 = sst [smem:[#allocation15]] 256
    %s106 = scalar_lea.smem [#allocation15], 1
    %107 = sst [smem:[%s106]] 256
    %s108 = scalar_lea.smem [#allocation15], 2
    %109 = sst [smem:[%s108]] 2
    %s110 = scalar_lea.smem [#allocation15], 3
    %111 = sst [smem:[%s110]] 64
    %s112 = scalar_lea.smem [#allocation15], 4
    %113 = sst [smem:[%s112]] 128
    %s114 = scalar_lea.smem [#allocation15], 5
    %115 = sst [smem:[%s114]] 2
    %s116 = scalar_lea.smem [#allocation15], 6
    %117 = sst [smem:[%s116]] 128
    %s118 = scalar_lea.smem [#allocation15], 7
    %119 = sst [smem:[%s118]] 64
    %s120 = scalar_lea.smem [#allocation15], 8
    %121 = sst [smem:[%s120]] 4
    %123 = dma.general %s1, 4096, %s102, [#allocation3], [#allocation14], [#allocation15], %s100, 0
    %v124 = vld [vmem:[#allocation5] sm:$0xf]
    %v125 = vld [vmem:[#allocation5 + $0x4] sm:$0xf]
    %v126 = vld [vmem:[#allocation5 + $0x8] sm:$0xf]
    %v127 = vld [vmem:[#allocation5 + $0xc] sm:$0xf]
    %v128 = vld [vmem:[#allocation5 + $0x10] sm:$0xf]
    %v129 = vld [vmem:[#allocation5 + $0x14] sm:$0xf]
    %v130 = vld [vmem:[#allocation5 + $0x18] sm:$0xf]
    %v131 = vld [vmem:[#allocation5 + $0x1c] sm:$0xf]
    %v132 = vld [vmem:[#allocation5 + $0x20] sm:$0xf]
    %v133 = vld [vmem:[#allocation5 + $0x24] sm:$0xf]
    %v134 = vld [vmem:[#allocation5 + $0x28] sm:$0xf]
    %v135 = vld [vmem:[#allocation5 + $0x2c] sm:$0xf]
    %v136 = vld [vmem:[#allocation5 + $0x30] sm:$0xf]
    %v137 = vld [vmem:[#allocation5 + $0x34] sm:$0xf]
    %v138 = vld [vmem:[#allocation5 + $0x38] sm:$0xf]
    %v139 = vld [vmem:[#allocation5 + $0x3c] sm:$0xf]
    %v140 = vld [vmem:[#allocation5 + $0x40] sm:$0xf]
    %v141 = vld [vmem:[#allocation5 + $0x44] sm:$0xf]
    %v142 = vld [vmem:[#allocation5 + $0x48] sm:$0xf]
    %v143 = vld [vmem:[#allocation5 + $0x4c] sm:$0xf]
    %v144 = vld [vmem:[#allocation5 + $0x50] sm:$0xf]
    %v145 = vld [vmem:[#allocation5 + $0x54] sm:$0xf]
    %v146 = vld [vmem:[#allocation5 + $0x58] sm:$0xf]
    %v147 = vld [vmem:[#allocation5 + $0x5c] sm:$0xf]
    %v148 = vld [vmem:[#allocation5 + $0x60] sm:$0xf]
    %v149 = vld [vmem:[#allocation5 + $0x64] sm:$0xf]
    %v150 = vld [vmem:[#allocation5 + $0x68] sm:$0xf]
    %v151 = vld [vmem:[#allocation5 + $0x6c] sm:$0xf]
    %v152 = vld [vmem:[#allocation5 + $0x70] sm:$0xf]
    %v153 = vld [vmem:[#allocation5 + $0x74] sm:$0xf]
    %v154 = vld [vmem:[#allocation5 + $0x78] sm:$0xf]
    %v155 = vld [vmem:[#allocation5 + $0x7c] sm:$0xf]
    %v156 = vld [vmem:[#allocation8] sm:$0xf]
    %v157 = vld [vmem:[#allocation8 + $0x4] sm:$0xf]
    %v158 = vld [vmem:[#allocation8 + $0x8] sm:$0xf]
    %v159 = vld [vmem:[#allocation8 + $0xc] sm:$0xf]
    %v160 = vld [vmem:[#allocation8 + $0x10] sm:$0xf]
    %v161 = vld [vmem:[#allocation8 + $0x14] sm:$0xf]
    %v162 = vld [vmem:[#allocation8 + $0x18] sm:$0xf]
    %v163 = vld [vmem:[#allocation8 + $0x1c] sm:$0xf]
    %v164 = vld [vmem:[#allocation8 + $0x20] sm:$0xf]
    %v165 = vld [vmem:[#allocation8 + $0x24] sm:$0xf]
    %v166 = vld [vmem:[#allocation8 + $0x28] sm:$0xf]
    %v167 = vld [vmem:[#allocation8 + $0x2c] sm:$0xf]
    %v168 = vld [vmem:[#allocation8 + $0x30] sm:$0xf]
    %v169 = vld [vmem:[#allocation8 + $0x34] sm:$0xf]
    %v170 = vld [vmem:[#allocation8 + $0x38] sm:$0xf]
    %v171 = vld [vmem:[#allocation8 + $0x3c] sm:$0xf]
    %v172 = vld [vmem:[%s4] sm:$0x1]
    %v174 = vlaneseq
    %v175 = vshrl.u32 %v174, 7
    %v176 = vsub.s32 0, %v175
    %v177 = vrot.slane %v172, %v176
    %v211 = vunpack.c.l.b16 %v124
    %v212 = vunpack.c.l.b16 %v125
    %v213 = vunpack.c.l.b16 %v126
    %v214 = vunpack.c.l.b16 %v127
    %v215 = vunpack.c.l.b16 %v128
    %v216 = vunpack.c.l.b16 %v129
    %v217 = vunpack.c.l.b16 %v130
    %v218 = vunpack.c.l.b16 %v131
    %v219 = vunpack.c.l.b16 %v132
    %v220 = vunpack.c.l.b16 %v133
    %v221 = vunpack.c.l.b16 %v134
    %v222 = vunpack.c.l.b16 %v135
    %v223 = vunpack.c.l.b16 %v136
    %v224 = vunpack.c.l.b16 %v137
    %v225 = vunpack.c.l.b16 %v138
    %v226 = vunpack.c.l.b16 %v139
    %v227 = vunpack.c.l.b16 %v140
    %v228 = vunpack.c.l.b16 %v141
    %v229 = vunpack.c.l.b16 %v142
    %v230 = vunpack.c.l.b16 %v143
    %v231 = vunpack.c.l.b16 %v144
    %v232 = vunpack.c.l.b16 %v145
    %v233 = vunpack.c.l.b16 %v146
    %v234 = vunpack.c.l.b16 %v147
    %v235 = vunpack.c.l.b16 %v148
    %v236 = vunpack.c.l.b16 %v149
    %v237 = vunpack.c.l.b16 %v150
    %v238 = vunpack.c.l.b16 %v151
    %v239 = vunpack.c.l.b16 %v152
    %v240 = vunpack.c.l.b16 %v153
    %v241 = vunpack.c.l.b16 %v154
    %v242 = vunpack.c.l.b16 %v155
    %v243 = vpack.c.b16 %v212, %v211
    %v244 = vpack.c.b16 %v214, %v213
    %v245 = vpack.c.b16 %v216, %v215
    %v246 = vpack.c.b16 %v218, %v217
    %v247 = vpack.c.b16 %v220, %v219
    %v248 = vpack.c.b16 %v222, %v221
    %v249 = vpack.c.b16 %v224, %v223
    %v250 = vpack.c.b16 %v226, %v225
    %v251 = vpack.c.b16 %v228, %v227
    %v252 = vpack.c.b16 %v230, %v229
    %v253 = vpack.c.b16 %v232, %v231
    %v254 = vpack.c.b16 %v234, %v233
    %v255 = vpack.c.b16 %v236, %v235
    %v256 = vpack.c.b16 %v238, %v237
    %v257 = vpack.c.b16 %v240, %v239
    %v258 = vpack.c.b16 %v242, %v241
    %v291 = vunpack.c.l.b16 %v156
    %v292 = vunpack.c.l.b16 %v157
    %v293 = vunpack.c.l.b16 %v158
    %v294 = vunpack.c.l.b16 %v159
    %v295 = vunpack.c.l.b16 %v160
    %v296 = vunpack.c.l.b16 %v161
    %v297 = vunpack.c.l.b16 %v162
    %v298 = vunpack.c.l.b16 %v163
    %v299 = vunpack.c.l.b16 %v164
    %v300 = vunpack.c.l.b16 %v165
    %v301 = vunpack.c.l.b16 %v166
    %v302 = vunpack.c.l.b16 %v167
    %v303 = vunpack.c.l.b16 %v168
    %v304 = vunpack.c.l.b16 %v169
    %v305 = vunpack.c.l.b16 %v170
    %v306 = vunpack.c.l.b16 %v171
    %v307 = vpack.c.b16 %v292, %v291
    %v308 = vpack.c.b16 %v294, %v293
    %v309 = vpack.c.b16 %v296, %v295
    %v310 = vpack.c.b16 %v298, %v297
    %v311 = vpack.c.b16 %v300, %v299
    %v312 = vpack.c.b16 %v302, %v301
    %v313 = vpack.c.b16 %v304, %v303
    %v314 = vpack.c.b16 %v306, %v305
    %323 = vmatprep.subr.bf16.mxu0 0
    %324 = vmatpush1.bf16.msra.mxu0 %v307
    %325 = vmatprep.subr.bf16.mxu0 0
    %326 = vmatpush1.bf16.msra.mxu0 %v308
    %327 = vmatprep.subr.bf16.mxu0 0
    %328 = vmatpush1.bf16.msra.mxu0 %v309
    %329 = vmatprep.subr.bf16.mxu0 0
    %330 = vmatpush1.bf16.msra.mxu0 %v310
    %331 = vmatprep.subr.bf16.mxu0 0
    %332 = vmatpush1.bf16.msra.mxu0 %v311
    %333 = vmatprep.subr.bf16.mxu0 0
    %334 = vmatpush1.bf16.msra.mxu0 %v312
    %335 = vmatprep.subr.bf16.mxu0 0
    %336 = vmatpush1.bf16.msra.mxu0 %v313
    %337 = vmatprep.subr.bf16.mxu0 0
    %338 = vmatpush1.bf16.msra.mxu0 %v314
    %339 = vmatprep.subr.bf16.mxu0 0
    %340 = vmatpush1.bf16.msra.mxu0 0
    %341 = vmatprep.subr.bf16.mxu0 0
    %342 = vmatpush1.bf16.msra.mxu0 0
    %343 = vmatprep.subr.bf16.mxu0 0
    %344 = vmatpush1.bf16.msra.mxu0 0
    %345 = vmatprep.subr.bf16.mxu0 0
    %346 = vmatpush1.bf16.msra.mxu0 0
    %347 = vmatprep.subr.bf16.mxu0 0
    %348 = vmatpush1.bf16.msra.mxu0 0
    %349 = vmatprep.subr.bf16.mxu0 0
    %350 = vmatpush1.bf16.msra.mxu0 0
    %351 = vmatprep.subr.bf16.mxu0 0
    %352 = vmatpush1.bf16.msra.mxu0 0
    %353 = vmatprep.subr.bf16.mxu0 0
    %354 = vmatpush1.bf16.msra.mxu0 0
    %355 = vmatprep.mubr.bf16.mxu0 0
    %356 = vmatmul.mubr.bf16.gmra.mrb[0].mxu0 %v243
    %v357 = vpop.f32.mrb[0].mxu0
    %v358 = vadd.f32 %v177, %v357
    %v359 = vpop.f32.mrb[0].mxu0
    %v360 = vpop.f32.mrb[0].mxu0
    %v361 = vadd.f32 %v177, %v360
    %v362 = vpop.f32.mrb[0].mxu0
    %363 = vmatprep.mubr.bf16.mxu0 0
    %364 = vmatmul.mubr.bf16.gmra.mrb[0].mxu0 %v244
    %v365 = vpop.f32.mrb[0].mxu0
    %v366 = vadd.f32 %v177, %v365
    %v367 = vpop.f32.mrb[0].mxu0
    %v368 = vpop.f32.mrb[0].mxu0
    %v369 = vadd.f32 %v177, %v368
    %v370 = vpop.f32.mrb[0].mxu0
    %371 = vmatprep.mubr.bf16.mxu0 0
    %372 = vmatmul.mubr.bf16.gmra.mrb[0].mxu0 %v245
    %v373 = vpop.f32.mrb[0].mxu0
    %v374 = vadd.f32 %v177, %v373
    %v375 = vpop.f32.mrb[0].mxu0
    %v376 = vpop.f32.mrb[0].mxu0
    %v377 = vadd.f32 %v177, %v376
    %v378 = vpop.f32.mrb[0].mxu0
    %379 = vmatprep.mubr.bf16.mxu0 0
    %380 = vmatmul.mubr.bf16.gmra.mrb[0].mxu0 %v246
    %v381 = vpop.f32.mrb[0].mxu0
    %v382 = vadd.f32 %v177, %v381
    %v383 = vpop.f32.mrb[0].mxu0
    %v384 = vpop.f32.mrb[0].mxu0
    %v385 = vadd.f32 %v177, %v384
    %v386 = vpop.f32.mrb[0].mxu0
    %387 = vmatprep.mubr.bf16.mxu0 0
    %388 = vmatmul.mubr.bf16.gmra.mrb[0].mxu0 %v247
    %v389 = vpop.f32.mrb[0].mxu0
    %v390 = vadd.f32 %v177, %v389
    %v391 = vpop.f32.mrb[0].mxu0
    %v392 = vpop.f32.mrb[0].mxu0
    %v393 = vadd.f32 %v177, %v392
    %v394 = vpop.f32.mrb[0].mxu0
    %395 = vmatprep.mubr.bf16.mxu0 0
    %396 = vmatmul.mubr.bf16.gmra.mrb[0].mxu0 %v248
    %v397 = vpop.f32.mrb[0].mxu0
    %v398 = vadd.f32 %v177, %v397
    %v399 = vpop.f32.mrb[0].mxu0
    %v400 = vpop.f32.mrb[0].mxu0
    %v401 = vadd.f32 %v177, %v400
    %v402 = vpop.f32.mrb[0].mxu0
    %403 = vmatprep.mubr.bf16.mxu0 0
    %404 = vmatmul.mubr.bf16.gmra.mrb[0].mxu0 %v249
    %v405 = vpop.f32.mrb[0].mxu0
    %v406 = vadd.f32 %v177, %v405
    %v407 = vpop.f32.mrb[0].mxu0
    %v408 = vpop.f32.mrb[0].mxu0
    %v409 = vadd.f32 %v177, %v408
    %v410 = vpop.f32.mrb[0].mxu0
    %411 = vmatprep.mubr.bf16.mxu0 0
    %412 = vmatmul.mubr.bf16.gmra.mrb[0].mxu0 %v250
    %v413 = vpop.f32.mrb[0].mxu0
    %v414 = vadd.f32 %v177, %v413
    %v415 = vpop.f32.mrb[0].mxu0
    %v416 = vpop.f32.mrb[0].mxu0
    %v417 = vadd.f32 %v177, %v416
    %v418 = vpop.f32.mrb[0].mxu0
    %419 = vmatprep.mubr.bf16.mxu0 0
    %420 = vmatmul.mubr.bf16.gmra.mrb[0].mxu0 %v251
    %v421 = vpop.f32.mrb[0].mxu0
    %v422 = vadd.f32 %v177, %v421
    %v423 = vpop.f32.mrb[0].mxu0
    %v424 = vpop.f32.mrb[0].mxu0
    %v425 = vadd.f32 %v177, %v424
    %v426 = vpop.f32.mrb[0].mxu0
    %427 = vmatprep.mubr.bf16.mxu0 0
    %428 = vmatmul.mubr.bf16.gmra.mrb[0].mxu0 %v252
    %v429 = vpop.f32.mrb[0].mxu0
    %v430 = vadd.f32 %v177, %v429
    %v431 = vpop.f32.mrb[0].mxu0
    %v432 = vpop.f32.mrb[0].mxu0
    %v433 = vadd.f32 %v177, %v432
    %v434 = vpop.f32.mrb[0].mxu0
    %435 = vmatprep.mubr.bf16.mxu0 0
    %436 = vmatmul.mubr.bf16.gmra.mrb[0].mxu0 %v253
    %v437 = vpop.f32.mrb[0].mxu0
    %v438 = vadd.f32 %v177, %v437
    %v439 = vpop.f32.mrb[0].mxu0
    %v440 = vpop.f32.mrb[0].mxu0
    %v441 = vadd.f32 %v177, %v440
    %v442 = vpop.f32.mrb[0].mxu0
    %443 = vmatprep.mubr.bf16.mxu0 0
    %444 = vmatmul.mubr.bf16.gmra.mrb[0].mxu0 %v254
    %v445 = vpop.f32.mrb[0].mxu0
    %v446 = vadd.f32 %v177, %v445
    %v447 = vpop.f32.mrb[0].mxu0
    %v448 = vpop.f32.mrb[0].mxu0
    %v449 = vadd.f32 %v177, %v448
    %v450 = vpop.f32.mrb[0].mxu0
    %451 = vmatprep.mubr.bf16.mxu0 0
    %452 = vmatmul.mubr.bf16.gmra.mrb[0].mxu0 %v255
    %v453 = vpop.f32.mrb[0].mxu0
    %v454 = vadd.f32 %v177, %v453
    %v455 = vpop.f32.mrb[0].mxu0
    %v456 = vpop.f32.mrb[0].mxu0
    %v457 = vadd.f32 %v177, %v456
    %v458 = vpop.f32.mrb[0].mxu0
    %459 = vmatprep.mubr.bf16.mxu0 0
    %460 = vmatmul.mubr.bf16.gmra.mrb[0].mxu0 %v256
    %v461 = vpop.f32.mrb[0].mxu0
    %v462 = vadd.f32 %v177, %v461
    %v463 = vpop.f32.mrb[0].mxu0
    %v464 = vpop.f32.mrb[0].mxu0
    %v465 = vadd.f32 %v177, %v464
    %v466 = vpop.f32.mrb[0].mxu0
    %467 = vmatprep.mubr.bf16.mxu0 0
    %468 = vmatmul.mubr.bf16.gmra.mrb[0].mxu0 %v257
    %v469 = vpop.f32.mrb[0].mxu0
    %v470 = vadd.f32 %v177, %v469
    %v471 = vpop.f32.mrb[0].mxu0
    %v472 = vpop.f32.mrb[0].mxu0
    %v473 = vadd.f32 %v177, %v472
    %v474 = vpop.f32.mrb[0].mxu0
    %475 = vmatprep.mubr.bf16.mxu0 0
    %476 = vmatmul.mubr.bf16.gmra.mrb[0].mxu0 %v258
    %v477 = vpop.f32.mrb[0].mxu0
    %v478 = vadd.f32 %v177, %v477
    %v479 = vpop.f32.mrb[0].mxu0
    %v480 = vpop.f32.mrb[0].mxu0
    %v481 = vadd.f32 %v177, %v480
    %v482 = vpop.f32.mrb[0].mxu0
    %483 = vdwg.mxu0
    %v484 = vmax.f32 %v358, 0.0
    %v485 = vmax.f32 %v361, 0.0
    %v486 = vmax.f32 %v366, 0.0
    %v487 = vmax.f32 %v369, 0.0
    %v488 = vmax.f32 %v374, 0.0
    %v489 = vmax.f32 %v377, 0.0
    %v490 = vmax.f32 %v382, 0.0
    %v491 = vmax.f32 %v385, 0.0
    %v492 = vmax.f32 %v390, 0.0
    %v493 = vmax.f32 %v393, 0.0
    %v494 = vmax.f32 %v398, 0.0
    %v495 = vmax.f32 %v401, 0.0
    %v496 = vmax.f32 %v406, 0.0
    %v497 = vmax.f32 %v409, 0.0
    %v498 = vmax.f32 %v414, 0.0
    %v499 = vmax.f32 %v417, 0.0
    %v500 = vmax.f32 %v422, 0.0
    %v501 = vmax.f32 %v425, 0.0
    %v502 = vmax.f32 %v430, 0.0
    %v503 = vmax.f32 %v433, 0.0
    %v504 = vmax.f32 %v438, 0.0
    %v505 = vmax.f32 %v441, 0.0
    %v506 = vmax.f32 %v446, 0.0
    %v507 = vmax.f32 %v449, 0.0
    %v508 = vmax.f32 %v454, 0.0
    %v509 = vmax.f32 %v457, 0.0
    %v510 = vmax.f32 %v462, 0.0
    %v511 = vmax.f32 %v465, 0.0
    %v512 = vmax.f32 %v470, 0.0
    %v513 = vmax.f32 %v473, 0.0
    %v514 = vmax.f32 %v478, 0.0
    %v515 = vmax.f32 %v481, 0.0
    %v516 = vpack.c.bf16 %v485, %v484
    %v517 = vpack.c.bf16 %v487, %v486
    %v518 = vpack.c.bf16 %v489, %v488
    %v519 = vpack.c.bf16 %v491, %v490
    %v520 = vpack.c.bf16 %v493, %v492
    %v521 = vpack.c.bf16 %v495, %v494
    %v522 = vpack.c.bf16 %v497, %v496
    %v523 = vpack.c.bf16 %v499, %v498
    %v524 = vpack.c.bf16 %v501, %v500
    %v525 = vpack.c.bf16 %v503, %v502
    %v526 = vpack.c.bf16 %v505, %v504
    %v527 = vpack.c.bf16 %v507, %v506
    %v528 = vpack.c.bf16 %v509, %v508
    %v529 = vpack.c.bf16 %v511, %v510
    %v530 = vpack.c.bf16 %v513, %v512
    %v531 = vpack.c.bf16 %v515, %v514
    %v532 = vld [vmem:[#allocation10] sm:$0xf]
    %v533 = vld [vmem:[#allocation10 + $0x4] sm:$0xf]
    %v534 = vld [vmem:[#allocation10 + $0x8] sm:$0xf]
    %v535 = vld [vmem:[#allocation10 + $0xc] sm:$0xf]
    %v536 = vld [vmem:[#allocation10 + $0x10] sm:$0xf]
    %v537 = vld [vmem:[#allocation10 + $0x14] sm:$0xf]
    %v538 = vld [vmem:[#allocation10 + $0x18] sm:$0xf]
    %v539 = vld [vmem:[#allocation10 + $0x1c] sm:$0xf]
    %v540 = vld [vmem:[#allocation10 + $0x20] sm:$0xf]
    %v541 = vld [vmem:[#allocation10 + $0x24] sm:$0xf]
    %v542 = vld [vmem:[#allocation10 + $0x28] sm:$0xf]
    %v543 = vld [vmem:[#allocation10 + $0x2c] sm:$0xf]
    %v544 = vld [vmem:[#allocation10 + $0x30] sm:$0xf]
    %v545 = vld [vmem:[#allocation10 + $0x34] sm:$0xf]
    %v546 = vld [vmem:[#allocation10 + $0x38] sm:$0xf]
    %v547 = vld [vmem:[#allocation10 + $0x3c] sm:$0xf]
    %v548 = vld [vmem:[%s6] sm:$0x1]
    %v550 = vlaneseq
    %v551 = vshrl.u32 %v550, 7
    %v552 = vsub.s32 0, %v551
    %v553 = vrot.slane %v548, %v552
    %v571 = vunpack.c.l.b16 %v532
    %v572 = vunpack.c.l.b16 %v533
    %v573 = vunpack.c.l.b16 %v534
    %v574 = vunpack.c.l.b16 %v535
    %v575 = vunpack.c.l.b16 %v536
    %v576 = vunpack.c.l.b16 %v537
    %v577 = vunpack.c.l.b16 %v538
    %v578 = vunpack.c.l.b16 %v539
    %v579 = vunpack.c.l.b16 %v540
    %v580 = vunpack.c.l.b16 %v541
    %v581 = vunpack.c.l.b16 %v542
    %v582 = vunpack.c.l.b16 %v543
    %v583 = vunpack.c.l.b16 %v544
    %v584 = vunpack.c.l.b16 %v545
    %v585 = vunpack.c.l.b16 %v546
    %v586 = vunpack.c.l.b16 %v547
    %v587 = vpack.c.b16 %v572, %v571
    %v588 = vpack.c.b16 %v574, %v573
    %v589 = vpack.c.b16 %v576, %v575
    %v590 = vpack.c.b16 %v578, %v577
    %v591 = vpack.c.b16 %v580, %v579
    %v592 = vpack.c.b16 %v582, %v581
    %v593 = vpack.c.b16 %v584, %v583
    %v594 = vpack.c.b16 %v586, %v585
    %603 = vmatprep.subr.bf16.mxu0 0
    %604 = vmatpush1.bf16.msra.mxu0 %v587
    %605 = vmatprep.subr.bf16.mxu0 0
    %606 = vmatpush1.bf16.msra.mxu0 %v588
    %607 = vmatprep.subr.bf16.mxu0 0
    %608 = vmatpush1.bf16.msra.mxu0 %v589
    %609 = vmatprep.subr.bf16.mxu0 0
    %610 = vmatpush1.bf16.msra.mxu0 %v590
    %611 = vmatprep.subr.bf16.mxu0 0
    %612 = vmatpush1.bf16.msra.mxu0 %v591
    %613 = vmatprep.subr.bf16.mxu0 0
    %614 = vmatpush1.bf16.msra.mxu0 %v592
    %615 = vmatprep.subr.bf16.mxu0 0
    %616 = vmatpush1.bf16.msra.mxu0 %v593
    %617 = vmatprep.subr.bf16.mxu0 0
    %618 = vmatpush1.bf16.msra.mxu0 %v594
    %619 = vmatprep.subr.bf16.mxu0 0
    %620 = vmatpush1.bf16.msra.mxu0 0
    %621 = vmatprep.subr.bf16.mxu0 0
    %622 = vmatpush1.bf16.msra.mxu0 0
    %623 = vmatprep.subr.bf16.mxu0 0
    %624 = vmatpush1.bf16.msra.mxu0 0
    %625 = vmatprep.subr.bf16.mxu0 0
    %626 = vmatpush1.bf16.msra.mxu0 0
    %627 = vmatprep.subr.bf16.mxu0 0
    %628 = vmatpush1.bf16.msra.mxu0 0
    %629 = vmatprep.subr.bf16.mxu0 0
    %630 = vmatpush1.bf16.msra.mxu0 0
    %631 = vmatprep.subr.bf16.mxu0 0
    %632 = vmatpush1.bf16.msra.mxu0 0
    %633 = vmatprep.subr.bf16.mxu0 0
    %634 = vmatpush1.bf16.msra.mxu0 0
    %635 = vmatprep.mubr.bf16.mxu0 0
    %636 = vmatmul.mubr.bf16.gmra.mrb[0].mxu0 %v516
    %v637 = vpop.f32.mrb[0].mxu0
    %v638 = vadd.f32 %v553, %v637
    %v639 = vpop.f32.mrb[0].mxu0
    %v640 = vpop.f32.mrb[0].mxu0
    %v641 = vadd.f32 %v553, %v640
    %v642 = vpop.f32.mrb[0].mxu0
    %643 = vmatprep.mubr.bf16.mxu0 0
    %644 = vmatmul.mubr.bf16.gmra.mrb[0].mxu0 %v517
    %v645 = vpop.f32.mrb[0].mxu0
    %v646 = vadd.f32 %v553, %v645
    %v647 = vpop.f32.mrb[0].mxu0
    %v648 = vpop.f32.mrb[0].mxu0
    %v649 = vadd.f32 %v553, %v648
    %v650 = vpop.f32.mrb[0].mxu0
    %651 = vmatprep.mubr.bf16.mxu0 0
    %652 = vmatmul.mubr.bf16.gmra.mrb[0].mxu0 %v518
    %v653 = vpop.f32.mrb[0].mxu0
    %v654 = vadd.f32 %v553, %v653
    %v655 = vpop.f32.mrb[0].mxu0
    %v656 = vpop.f32.mrb[0].mxu0
    %v657 = vadd.f32 %v553, %v656
    %v658 = vpop.f32.mrb[0].mxu0
    %659 = vmatprep.mubr.bf16.mxu0 0
    %660 = vmatmul.mubr.bf16.gmra.mrb[0].mxu0 %v519
    %v661 = vpop.f32.mrb[0].mxu0
    %v662 = vadd.f32 %v553, %v661
    %v663 = vpop.f32.mrb[0].mxu0
    %v664 = vpop.f32.mrb[0].mxu0
    %v665 = vadd.f32 %v553, %v664
    %v666 = vpop.f32.mrb[0].mxu0
    %667 = vmatprep.mubr.bf16.mxu0 0
    %668 = vmatmul.mubr.bf16.gmra.mrb[0].mxu0 %v520
    %v669 = vpop.f32.mrb[0].mxu0
    %v670 = vadd.f32 %v553, %v669
    %v671 = vpop.f32.mrb[0].mxu0
    %v672 = vpop.f32.mrb[0].mxu0
    %v673 = vadd.f32 %v553, %v672
    %v674 = vpop.f32.mrb[0].mxu0
    %675 = vmatprep.mubr.bf16.mxu0 0
    %676 = vmatmul.mubr.bf16.gmra.mrb[0].mxu0 %v521
    %v677 = vpop.f32.mrb[0].mxu0
    %v678 = vadd.f32 %v553, %v677
    %v679 = vpop.f32.mrb[0].mxu0
    %v680 = vpop.f32.mrb[0].mxu0
    %v681 = vadd.f32 %v553, %v680
    %v682 = vpop.f32.mrb[0].mxu0
    %683 = vmatprep.mubr.bf16.mxu0 0
    %684 = vmatmul.mubr.bf16.gmra.mrb[0].mxu0 %v522
    %v685 = vpop.f32.mrb[0].mxu0
    %v686 = vadd.f32 %v553, %v685
    %v687 = vpop.f32.mrb[0].mxu0
    %v688 = vpop.f32.mrb[0].mxu0
    %v689 = vadd.f32 %v553, %v688
    %v690 = vpop.f32.mrb[0].mxu0
    %691 = vmatprep.mubr.bf16.mxu0 0
    %692 = vmatmul.mubr.bf16.gmra.mrb[0].mxu0 %v523
    %v693 = vpop.f32.mrb[0].mxu0
    %v694 = vadd.f32 %v553, %v693
    %v695 = vpop.f32.mrb[0].mxu0
    %v696 = vpop.f32.mrb[0].mxu0
    %v697 = vadd.f32 %v553, %v696
    %v698 = vpop.f32.mrb[0].mxu0
    %699 = vmatprep.mubr.bf16.mxu0 0
    %700 = vmatmul.mubr.bf16.gmra.mrb[0].mxu0 %v524
    %v701 = vpop.f32.mrb[0].mxu0
    %v702 = vadd.f32 %v553, %v701
    %v703 = vpop.f32.mrb[0].mxu0
    %v704 = vpop.f32.mrb[0].mxu0
    %v705 = vadd.f32 %v553, %v704
    %v706 = vpop.f32.mrb[0].mxu0
    %707 = vmatprep.mubr.bf16.mxu0 0
    %708 = vmatmul.mubr.bf16.gmra.mrb[0].mxu0 %v525
    %v709 = vpop.f32.mrb[0].mxu0
    %v710 = vadd.f32 %v553, %v709
    %v711 = vpop.f32.mrb[0].mxu0
    %v712 = vpop.f32.mrb[0].mxu0
    %v713 = vadd.f32 %v553, %v712
    %v714 = vpop.f32.mrb[0].mxu0
    %715 = vmatprep.mubr.bf16.mxu0 0
    %716 = vmatmul.mubr.bf16.gmra.mrb[0].mxu0 %v526
    %v717 = vpop.f32.mrb[0].mxu0
    %v718 = vadd.f32 %v553, %v717
    %v719 = vpop.f32.mrb[0].mxu0
    %v720 = vpop.f32.mrb[0].mxu0
    %v721 = vadd.f32 %v553, %v720
    %v722 = vpop.f32.mrb[0].mxu0
    %723 = vmatprep.mubr.bf16.mxu0 0
    %724 = vmatmul.mubr.bf16.gmra.mrb[0].mxu0 %v527
    %v725 = vpop.f32.mrb[0].mxu0
    %v726 = vadd.f32 %v553, %v725
    %v727 = vpop.f32.mrb[0].mxu0
    %v728 = vpop.f32.mrb[0].mxu0
    %v729 = vadd.f32 %v553, %v728
    %v730 = vpop.f32.mrb[0].mxu0
    %731 = vmatprep.mubr.bf16.mxu0 0
    %732 = vmatmul.mubr.bf16.gmra.mrb[0].mxu0 %v528
    %v733 = vpop.f32.mrb[0].mxu0
    %v734 = vadd.f32 %v553, %v733
    %v735 = vpop.f32.mrb[0].mxu0
    %v736 = vpop.f32.mrb[0].mxu0
    %v737 = vadd.f32 %v553, %v736
    %v738 = vpop.f32.mrb[0].mxu0
    %739 = vmatprep.mubr.bf16.mxu0 0
    %740 = vmatmul.mubr.bf16.gmra.mrb[0].mxu0 %v529
    %v741 = vpop.f32.mrb[0].mxu0
    %v742 = vadd.f32 %v553, %v741
    %v743 = vpop.f32.mrb[0].mxu0
    %v744 = vpop.f32.mrb[0].mxu0
    %v745 = vadd.f32 %v553, %v744
    %v746 = vpop.f32.mrb[0].mxu0
    %747 = vmatprep.mubr.bf16.mxu0 0
    %748 = vmatmul.mubr.bf16.gmra.mrb[0].mxu0 %v530
    %v749 = vpop.f32.mrb[0].mxu0
    %v750 = vadd.f32 %v553, %v749
    %v751 = vpop.f32.mrb[0].mxu0
    %v752 = vpop.f32.mrb[0].mxu0
    %v753 = vadd.f32 %v553, %v752
    %v754 = vpop.f32.mrb[0].mxu0
    %755 = vmatprep.mubr.bf16.mxu0 0
    %756 = vmatmul.mubr.bf16.gmra.mrb[0].mxu0 %v531
    %v757 = vpop.f32.mrb[0].mxu0
    %v758 = vadd.f32 %v553, %v757
    %v759 = vpop.f32.mrb[0].mxu0
    %v760 = vpop.f32.mrb[0].mxu0
    %v761 = vadd.f32 %v553, %v760
    %v762 = vpop.f32.mrb[0].mxu0
    %763 = vdwg.mxu0
    %v764 = vmax.f32 %v638, 0.0
    %v765 = vmax.f32 %v641, 0.0
    %v766 = vmax.f32 %v646, 0.0
    %v767 = vmax.f32 %v649, 0.0
    %v768 = vmax.f32 %v654, 0.0
    %v769 = vmax.f32 %v657, 0.0
    %v770 = vmax.f32 %v662, 0.0
    %v771 = vmax.f32 %v665, 0.0
    %v772 = vmax.f32 %v670, 0.0
    %v773 = vmax.f32 %v673, 0.0
    %v774 = vmax.f32 %v678, 0.0
    %v775 = vmax.f32 %v681, 0.0
    %v776 = vmax.f32 %v686, 0.0
    %v777 = vmax.f32 %v689, 0.0
    %v778 = vmax.f32 %v694, 0.0
    %v779 = vmax.f32 %v697, 0.0
    %v780 = vmax.f32 %v702, 0.0
    %v781 = vmax.f32 %v705, 0.0
    %v782 = vmax.f32 %v710, 0.0
    %v783 = vmax.f32 %v713, 0.0
    %v784 = vmax.f32 %v718, 0.0
    %v785 = vmax.f32 %v721, 0.0
    %v786 = vmax.f32 %v726, 0.0
    %v787 = vmax.f32 %v729, 0.0
    %v788 = vmax.f32 %v734, 0.0
    %v789 = vmax.f32 %v737, 0.0
    %v790 = vmax.f32 %v742, 0.0
    %v791 = vmax.f32 %v745, 0.0
    %v792 = vmax.f32 %v750, 0.0
    %v793 = vmax.f32 %v753, 0.0
    %v794 = vmax.f32 %v758, 0.0
    %v795 = vmax.f32 %v761, 0.0
    %v796 = vpack.c.bf16 %v765, %v764
    %v797 = vpack.c.bf16 %v767, %v766
    %v798 = vpack.c.bf16 %v769, %v768
    %v799 = vpack.c.bf16 %v771, %v770
    %v800 = vpack.c.bf16 %v773, %v772
    %v801 = vpack.c.bf16 %v775, %v774
    %v802 = vpack.c.bf16 %v777, %v776
    %v803 = vpack.c.bf16 %v779, %v778
    %v804 = vpack.c.bf16 %v781, %v780
    %v805 = vpack.c.bf16 %v783, %v782
    %v806 = vpack.c.bf16 %v785, %v784
    %v807 = vpack.c.bf16 %v787, %v786
    %v808 = vpack.c.bf16 %v789, %v788
    %v809 = vpack.c.bf16 %v791, %v790
    %v810 = vpack.c.bf16 %v793, %v792
    %v811 = vpack.c.bf16 %v795, %v794
    %v812 = vld [vmem:[#allocation11] sm:$0xf]
    %v813 = vld [vmem:[#allocation11 + $0x4] sm:$0xf]
    %v814 = vld [vmem:[#allocation11 + $0x8] sm:$0xf]
    %v815 = vld [vmem:[#allocation11 + $0xc] sm:$0xf]
    %v816 = vld [vmem:[#allocation11 + $0x10] sm:$0xf]
    %v817 = vld [vmem:[#allocation11 + $0x14] sm:$0xf]
    %v818 = vld [vmem:[#allocation11 + $0x18] sm:$0xf]
    %v819 = vld [vmem:[#allocation11 + $0x1c] sm:$0xf]
    %v820 = vld [vmem:[#allocation11 + $0x20] sm:$0xf]
    %v821 = vld [vmem:[#allocation11 + $0x24] sm:$0xf]
    %v822 = vld [vmem:[#allocation11 + $0x28] sm:$0xf]
    %v823 = vld [vmem:[#allocation11 + $0x2c] sm:$0xf]
    %v824 = vld [vmem:[#allocation11 + $0x30] sm:$0xf]
    %v825 = vld [vmem:[#allocation11 + $0x34] sm:$0xf]
    %v826 = vld [vmem:[#allocation11 + $0x38] sm:$0xf]
    %v827 = vld [vmem:[#allocation11 + $0x3c] sm:$0xf]
    %v828 = vld [vmem:[%s8] sm:$0x1]
    %v830 = vlaneseq
    %v831 = vshrl.u32 %v830, 7
    %v832 = vsub.s32 0, %v831
    %v833 = vrot.slane %v828, %v832
    %v851 = vunpack.c.l.b16 %v812
    %v852 = vunpack.c.l.b16 %v813
    %v853 = vunpack.c.l.b16 %v814
    %v854 = vunpack.c.l.b16 %v815
    %v855 = vunpack.c.l.b16 %v816
    %v856 = vunpack.c.l.b16 %v817
    %v857 = vunpack.c.l.b16 %v818
    %v858 = vunpack.c.l.b16 %v819
    %v859 = vunpack.c.l.b16 %v820
    %v860 = vunpack.c.l.b16 %v821
    %v861 = vunpack.c.l.b16 %v822
    %v862 = vunpack.c.l.b16 %v823
    %v863 = vunpack.c.l.b16 %v824
    %v864 = vunpack.c.l.b16 %v825
    %v865 = vunpack.c.l.b16 %v826
    %v866 = vunpack.c.l.b16 %v827
    %v867 = vpack.c.b16 %v852, %v851
    %v868 = vpack.c.b16 %v854, %v853
    %v869 = vpack.c.b16 %v856, %v855
    %v870 = vpack.c.b16 %v858, %v857
    %v871 = vpack.c.b16 %v860, %v859
    %v872 = vpack.c.b16 %v862, %v861
    %v873 = vpack.c.b16 %v864, %v863
    %v874 = vpack.c.b16 %v866, %v865
    %883 = vmatprep.subr.bf16.mxu0 0
    %884 = vmatpush1.bf16.msra.mxu0 %v867
    %885 = vmatprep.subr.bf16.mxu0 0
    %886 = vmatpush1.bf16.msra.mxu0 %v868
    %887 = vmatprep.subr.bf16.mxu0 0
    %888 = vmatpush1.bf16.msra.mxu0 %v869
    %889 = vmatprep.subr.bf16.mxu0 0
    %890 = vmatpush1.bf16.msra.mxu0 %v870
    %891 = vmatprep.subr.bf16.mxu0 0
    %892 = vmatpush1.bf16.msra.mxu0 %v871
    %893 = vmatprep.subr.bf16.mxu0 0
    %894 = vmatpush1.bf16.msra.mxu0 %v872
    %895 = vmatprep.subr.bf16.mxu0 0
    %896 = vmatpush1.bf16.msra.mxu0 %v873
    %897 = vmatprep.subr.bf16.mxu0 0
    %898 = vmatpush1.bf16.msra.mxu0 %v874
    %899 = vmatprep.subr.bf16.mxu0 0
    %900 = vmatpush1.bf16.msra.mxu0 0
    %901 = vmatprep.subr.bf16.mxu0 0
    %902 = vmatpush1.bf16.msra.mxu0 0
    %903 = vmatprep.subr.bf16.mxu0 0
    %904 = vmatpush1.bf16.msra.mxu0 0
    %905 = vmatprep.subr.bf16.mxu0 0
    %906 = vmatpush1.bf16.msra.mxu0 0
    %907 = vmatprep.subr.bf16.mxu0 0
    %908 = vmatpush1.bf16.msra.mxu0 0
    %909 = vmatprep.subr.bf16.mxu0 0
    %910 = vmatpush1.bf16.msra.mxu0 0
    %911 = vmatprep.subr.bf16.mxu0 0
    %912 = vmatpush1.bf16.msra.mxu0 0
    %913 = vmatprep.subr.bf16.mxu0 0
    %914 = vmatpush1.bf16.msra.mxu0 0
    %915 = vmatprep.mubr.bf16.mxu0 0
    %916 = vmatmul.mubr.bf16.gmra.mrb[0].mxu0 %v796
    %v917 = vpop.f32.mrb[0].mxu0
    %v918 = vadd.f32 %v833, %v917
    %v919 = vpop.f32.mrb[0].mxu0
    %v920 = vpop.f32.mrb[0].mxu0
    %v921 = vadd.f32 %v833, %v920
    %v922 = vpop.f32.mrb[0].mxu0
    %923 = vmatprep.mubr.bf16.mxu0 0
    %924 = vmatmul.mubr.bf16.gmra.mrb[0].mxu0 %v797
    %v925 = vpop.f32.mrb[0].mxu0
    %v926 = vadd.f32 %v833, %v925
    %v927 = vpop.f32.mrb[0].mxu0
    %v928 = vpop.f32.mrb[0].mxu0
    %v929 = vadd.f32 %v833, %v928
    %v930 = vpop.f32.mrb[0].mxu0
    %931 = vmatprep.mubr.bf16.mxu0 0
    %932 = vmatmul.mubr.bf16.gmra.mrb[0].mxu0 %v798
    %v933 = vpop.f32.mrb[0].mxu0
    %v934 = vadd.f32 %v833, %v933
    %v935 = vpop.f32.mrb[0].mxu0
    %v936 = vpop.f32.mrb[0].mxu0
    %v937 = vadd.f32 %v833, %v936
    %v938 = vpop.f32.mrb[0].mxu0
    %939 = vmatprep.mubr.bf16.mxu0 0
    %940 = vmatmul.mubr.bf16.gmra.mrb[0].mxu0 %v799
    %v941 = vpop.f32.mrb[0].mxu0
    %v942 = vadd.f32 %v833, %v941
    %v943 = vpop.f32.mrb[0].mxu0
    %v944 = vpop.f32.mrb[0].mxu0
    %v945 = vadd.f32 %v833, %v944
    %v946 = vpop.f32.mrb[0].mxu0
    %947 = vmatprep.mubr.bf16.mxu0 0
    %948 = vmatmul.mubr.bf16.gmra.mrb[0].mxu0 %v800
    %v949 = vpop.f32.mrb[0].mxu0
    %v950 = vadd.f32 %v833, %v949
    %v951 = vpop.f32.mrb[0].mxu0
    %v952 = vpop.f32.mrb[0].mxu0
    %v953 = vadd.f32 %v833, %v952
    %v954 = vpop.f32.mrb[0].mxu0
    %955 = vmatprep.mubr.bf16.mxu0 0
    %956 = vmatmul.mubr.bf16.gmra.mrb[0].mxu0 %v801
    %v957 = vpop.f32.mrb[0].mxu0
    %v958 = vadd.f32 %v833, %v957
    %v959 = vpop.f32.mrb[0].mxu0
    %v960 = vpop.f32.mrb[0].mxu0
    %v961 = vadd.f32 %v833, %v960
    %v962 = vpop.f32.mrb[0].mxu0
    %963 = vmatprep.mubr.bf16.mxu0 0
    %964 = vmatmul.mubr.bf16.gmra.mrb[0].mxu0 %v802
    %v965 = vpop.f32.mrb[0].mxu0
    %v966 = vadd.f32 %v833, %v965
    %v967 = vpop.f32.mrb[0].mxu0
    %v968 = vpop.f32.mrb[0].mxu0
    %v969 = vadd.f32 %v833, %v968
    %v970 = vpop.f32.mrb[0].mxu0
    %971 = vmatprep.mubr.bf16.mxu0 0
    %972 = vmatmul.mubr.bf16.gmra.mrb[0].mxu0 %v803
    %v973 = vpop.f32.mrb[0].mxu0
    %v974 = vadd.f32 %v833, %v973
    %v975 = vpop.f32.mrb[0].mxu0
    %v976 = vpop.f32.mrb[0].mxu0
    %v977 = vadd.f32 %v833, %v976
    %v978 = vpop.f32.mrb[0].mxu0
    %979 = vmatprep.mubr.bf16.mxu0 0
    %980 = vmatmul.mubr.bf16.gmra.mrb[0].mxu0 %v804
    %v981 = vpop.f32.mrb[0].mxu0
    %v982 = vadd.f32 %v833, %v981
    %v983 = vpop.f32.mrb[0].mxu0
    %v984 = vpop.f32.mrb[0].mxu0
    %v985 = vadd.f32 %v833, %v984
    %v986 = vpop.f32.mrb[0].mxu0
    %987 = vmatprep.mubr.bf16.mxu0 0
    %988 = vmatmul.mubr.bf16.gmra.mrb[0].mxu0 %v805
    %v989 = vpop.f32.mrb[0].mxu0
    %v990 = vadd.f32 %v833, %v989
    %v991 = vpop.f32.mrb[0].mxu0
    %v992 = vpop.f32.mrb[0].mxu0
    %v993 = vadd.f32 %v833, %v992
    %v994 = vpop.f32.mrb[0].mxu0
    %995 = vmatprep.mubr.bf16.mxu0 0
    %996 = vmatmul.mubr.bf16.gmra.mrb[0].mxu0 %v806
    %v997 = vpop.f32.mrb[0].mxu0
    %v998 = vadd.f32 %v833, %v997
    %v999 = vpop.f32.mrb[0].mxu0
    %v1000 = vpop.f32.mrb[0].mxu0
    %v1001 = vadd.f32 %v833, %v1000
    %v1002 = vpop.f32.mrb[0].mxu0
    %1003 = vmatprep.mubr.bf16.mxu0 0
    %1004 = vmatmul.mubr.bf16.gmra.mrb[0].mxu0 %v807
    %v1005 = vpop.f32.mrb[0].mxu0
    %v1006 = vadd.f32 %v833, %v1005
    %v1007 = vpop.f32.mrb[0].mxu0
    %v1008 = vpop.f32.mrb[0].mxu0
    %v1009 = vadd.f32 %v833, %v1008
    %v1010 = vpop.f32.mrb[0].mxu0
    %1011 = vmatprep.mubr.bf16.mxu0 0
    %1012 = vmatmul.mubr.bf16.gmra.mrb[0].mxu0 %v808
    %v1013 = vpop.f32.mrb[0].mxu0
    %v1014 = vadd.f32 %v833, %v1013
    %v1015 = vpop.f32.mrb[0].mxu0
    %v1016 = vpop.f32.mrb[0].mxu0
    %v1017 = vadd.f32 %v833, %v1016
    %v1018 = vpop.f32.mrb[0].mxu0
    %1019 = vmatprep.mubr.bf16.mxu0 0
    %1020 = vmatmul.mubr.bf16.gmra.mrb[0].mxu0 %v809
    %v1021 = vpop.f32.mrb[0].mxu0
    %v1022 = vadd.f32 %v833, %v1021
    %v1023 = vpop.f32.mrb[0].mxu0
    %v1024 = vpop.f32.mrb[0].mxu0
    %v1025 = vadd.f32 %v833, %v1024
    %v1026 = vpop.f32.mrb[0].mxu0
    %1027 = vmatprep.mubr.bf16.mxu0 0
    %1028 = vmatmul.mubr.bf16.gmra.mrb[0].mxu0 %v810
    %v1029 = vpop.f32.mrb[0].mxu0
    %v1030 = vadd.f32 %v833, %v1029
    %v1031 = vpop.f32.mrb[0].mxu0
    %v1032 = vpop.f32.mrb[0].mxu0
    %v1033 = vadd.f32 %v833, %v1032
    %v1034 = vpop.f32.mrb[0].mxu0
    %1035 = vmatprep.mubr.bf16.mxu0 0
    %1036 = vmatmul.mubr.bf16.gmra.mrb[0].mxu0 %v811
    %v1037 = vpop.f32.mrb[0].mxu0
    %v1038 = vadd.f32 %v833, %v1037
    %v1039 = vpop.f32.mrb[0].mxu0
    %v1040 = vpop.f32.mrb[0].mxu0
    %v1041 = vadd.f32 %v833, %v1040
    %v1042 = vpop.f32.mrb[0].mxu0
    %1043 = vdwg.mxu0
    %v1044 = vstv %s88
    %v1045 = vmul.f32 %v1044, %v918
    %v1046 = vmul.f32 %v1044, %v921
    %v1047 = vmul.f32 %v1044, %v926
    %v1048 = vmul.f32 %v1044, %v929
    %v1049 = vmul.f32 %v1044, %v934
    %v1050 = vmul.f32 %v1044, %v937
    %v1051 = vmul.f32 %v1044, %v942
    %v1052 = vmul.f32 %v1044, %v945
    %v1053 = vmul.f32 %v1044, %v950
    %v1054 = vmul.f32 %v1044, %v953
    %v1055 = vmul.f32 %v1044, %v958
    %v1056 = vmul.f32 %v1044, %v961
    %v1057 = vmul.f32 %v1044, %v966
    %v1058 = vmul.f32 %v1044, %v969
    %v1059 = vmul.f32 %v1044, %v974
    %v1060 = vmul.f32 %v1044, %v977
    %v1061 = vmul.f32 %v1044, %v982
    %v1062 = vmul.f32 %v1044, %v985
    %v1063 = vmul.f32 %v1044, %v990
    %v1064 = vmul.f32 %v1044, %v993
    %v1065 = vmul.f32 %v1044, %v998
    %v1066 = vmul.f32 %v1044, %v1001
    %v1067 = vmul.f32 %v1044, %v1006
    %v1068 = vmul.f32 %v1044, %v1009
    %v1069 = vmul.f32 %v1044, %v1014
    %v1070 = vmul.f32 %v1044, %v1017
    %v1071 = vmul.f32 %v1044, %v1022
    %v1072 = vmul.f32 %v1044, %v1025
    %v1073 = vmul.f32 %v1044, %v1030
    %v1074 = vmul.f32 %v1044, %v1033
    %v1075 = vmul.f32 %v1044, %v1038
    %v1076 = vmul.f32 %v1044, %v1041
    %s1077 = smul.u32 4, 32
    %s1078 = smul.u32 %s1077, 2
    %s1079 = sshll.u32 %s1078, 4
    %1080 = dma.done [#allocation3], %s1079
    %v1081 = vld [vmem:[#allocation2] sm:$0xff]
    %v1082 = vld [vmem:[#allocation2 + $0x8] sm:$0xff]
    %v1083 = vld [vmem:[#allocation2 + $0x10] sm:$0xff]
    %v1084 = vld [vmem:[#allocation2 + $0x18] sm:$0xff]
    %v1085 = vld [vmem:[#allocation2 + $0x20] sm:$0xff]
    %v1086 = vld [vmem:[#allocation2 + $0x28] sm:$0xff]
    %v1087 = vld [vmem:[#allocation2 + $0x30] sm:$0xff]
    %v1088 = vld [vmem:[#allocation2 + $0x38] sm:$0xff]
    %v1089 = vld [vmem:[#allocation2 + $0x40] sm:$0xff]
    %v1090 = vld [vmem:[#allocation2 + $0x48] sm:$0xff]
    %v1091 = vld [vmem:[#allocation2 + $0x50] sm:$0xff]
    %v1092 = vld [vmem:[#allocation2 + $0x58] sm:$0xff]
    %v1093 = vld [vmem:[#allocation2 + $0x60] sm:$0xff]
    %v1094 = vld [vmem:[#allocation2 + $0x68] sm:$0xff]
    %v1095 = vld [vmem:[#allocation2 + $0x70] sm:$0xff]
    %v1096 = vld [vmem:[#allocation2 + $0x78] sm:$0xff]
    %v1097 = vld [vmem:[#allocation2 + $0x80] sm:$0xff]
    %v1098 = vld [vmem:[#allocation2 + $0x88] sm:$0xff]
    %v1099 = vld [vmem:[#allocation2 + $0x90] sm:$0xff]
    %v1100 = vld [vmem:[#allocation2 + $0x98] sm:$0xff]
    %v1101 = vld [vmem:[#allocation2 + $0xa0] sm:$0xff]
    %v1102 = vld [vmem:[#allocation2 + $0xa8] sm:$0xff]
    %v1103 = vld [vmem:[#allocation2 + $0xb0] sm:$0xff]
    %v1104 = vld [vmem:[#allocation2 + $0xb8] sm:$0xff]
    %v1105 = vld [vmem:[#allocation2 + $0xc0] sm:$0xff]
    %v1106 = vld [vmem:[#allocation2 + $0xc8] sm:$0xff]
    %v1107 = vld [vmem:[#allocation2 + $0xd0] sm:$0xff]
    %v1108 = vld [vmem:[#allocation2 + $0xd8] sm:$0xff]
    %v1109 = vld [vmem:[#allocation2 + $0xe0] sm:$0xff]
    %v1110 = vld [vmem:[#allocation2 + $0xe8] sm:$0xff]
    %v1111 = vld [vmem:[#allocation2 + $0xf0] sm:$0xff]
    %v1112 = vld [vmem:[#allocation2 + $0xf8] sm:$0xff]
    %v1113 = vpack.c.bf16 %v921, %v918
    %v1114 = vpack.c.bf16 %v929, %v926
    %v1115 = vpack.c.bf16 %v937, %v934
    %v1116 = vpack.c.bf16 %v945, %v942
    %v1117 = vpack.c.bf16 %v953, %v950
    %v1118 = vpack.c.bf16 %v961, %v958
    %v1119 = vpack.c.bf16 %v969, %v966
    %v1120 = vpack.c.bf16 %v977, %v974
    %v1121 = vpack.c.bf16 %v985, %v982
    %v1122 = vpack.c.bf16 %v993, %v990
    %v1123 = vpack.c.bf16 %v1001, %v998
    %v1124 = vpack.c.bf16 %v1009, %v1006
    %v1125 = vpack.c.bf16 %v1017, %v1014
    %v1126 = vpack.c.bf16 %v1025, %v1022
    %v1127 = vpack.c.bf16 %v1033, %v1030
    %v1128 = vpack.c.bf16 %v1041, %v1038
    %1129 = vmatprep.subr.bf16.mxu0 0
    %1130 = vmatpush1.bf16.msra.mxu0 %v1113
    %1131 = vmatprep.subr.bf16.mxu0 0
    %1132 = vmatpush1.bf16.msra.mxu0 %v1114
    %1133 = vmatprep.subr.bf16.mxu0 0
    %1134 = vmatpush1.bf16.msra.mxu0 %v1115
    %1135 = vmatprep.subr.bf16.mxu0 0
    %1136 = vmatpush1.bf16.msra.mxu0 %v1116
    %1137 = vmatprep.subr.bf16.mxu0 0
    %1138 = vmatpush1.bf16.msra.mxu0 %v1117
    %1139 = vmatprep.subr.bf16.mxu0 0
    %1140 = vmatpush1.bf16.msra.mxu0 %v1118
    %1141 = vmatprep.subr.bf16.mxu0 0
    %1142 = vmatpush1.bf16.msra.mxu0 %v1119
    %1143 = vmatprep.subr.bf16.mxu0 0
    %1144 = vmatpush1.bf16.msra.mxu0 %v1120
    %1145 = vmatprep.subr.bf16.mxu0 0
    %1146 = vmatpush1.bf16.msra.mxu0 %v1121
    %1147 = vmatprep.subr.bf16.mxu0 0
    %1148 = vmatpush1.bf16.msra.mxu0 %v1122
    %1149 = vmatprep.subr.bf16.mxu0 0
    %1150 = vmatpush1.bf16.msra.mxu0 %v1123
    %1151 = vmatprep.subr.bf16.mxu0 0
    %1152 = vmatpush1.bf16.msra.mxu0 %v1124
    %1153 = vmatprep.subr.bf16.mxu0 0
    %1154 = vmatpush1.bf16.msra.mxu0 %v1125
    %1155 = vmatprep.subr.bf16.mxu0 0
    %1156 = vmatpush1.bf16.msra.mxu0 %v1126
    %1157 = vmatprep.subr.bf16.mxu0 0
    %1158 = vmatpush1.bf16.msra.mxu0 %v1127
    %1159 = vmatprep.subr.bf16.mxu0 0
    %1160 = vmatpush1.bf16.msra.mxu0 %v1128
    %1161 = vmatprep.mubr.bf16.mxu0 %v1082
    %1162 = vmatmul.mubr.bf16.gmra.mrb[0].mxu0 %v1081
    %v1163 = vpop.f32.mrb[0].mxu0
    %v1164 = vadd.f32 %v1045, %v1163
    %v1165 = vpop.f32.mrb[0].mxu0
    %v1166 = vpop.f32.mrb[0].mxu0
    %v1167 = vadd.f32 %v1046, %v1166
    %v1168 = vpop.f32.mrb[0].mxu0
    %1169 = vmatprep.mubr.bf16.mxu0 %v1084
    %1170 = vmatmul.mubr.bf16.gmra.mrb[0].mxu0 %v1083
    %v1171 = vpop.f32.mrb[0].mxu0
    %v1172 = vadd.f32 %v1047, %v1171
    %v1173 = vpop.f32.mrb[0].mxu0
    %v1174 = vpop.f32.mrb[0].mxu0
    %v1175 = vadd.f32 %v1048, %v1174
    %v1176 = vpop.f32.mrb[0].mxu0
    %1177 = vmatprep.mubr.bf16.mxu0 %v1086
    %1178 = vmatmul.mubr.bf16.gmra.mrb[0].mxu0 %v1085
    %v1179 = vpop.f32.mrb[0].mxu0
    %v1180 = vadd.f32 %v1049, %v1179
    %v1181 = vpop.f32.mrb[0].mxu0
    %v1182 = vpop.f32.mrb[0].mxu0
    %v1183 = vadd.f32 %v1050, %v1182
    %v1184 = vpop.f32.mrb[0].mxu0
    %1185 = vmatprep.mubr.bf16.mxu0 %v1088
    %1186 = vmatmul.mubr.bf16.gmra.mrb[0].mxu0 %v1087
    %v1187 = vpop.f32.mrb[0].mxu0
    %v1188 = vadd.f32 %v1051, %v1187
    %v1189 = vpop.f32.mrb[0].mxu0
    %v1190 = vpop.f32.mrb[0].mxu0
    %v1191 = vadd.f32 %v1052, %v1190
    %v1192 = vpop.f32.mrb[0].mxu0
    %1193 = vmatprep.mubr.bf16.mxu0 %v1090
    %1194 = vmatmul.mubr.bf16.gmra.mrb[0].mxu0 %v1089
    %v1195 = vpop.f32.mrb[0].mxu0
    %v1196 = vadd.f32 %v1053, %v1195
    %v1197 = vpop.f32.mrb[0].mxu0
    %v1198 = vpop.f32.mrb[0].mxu0
    %v1199 = vadd.f32 %v1054, %v1198
    %v1200 = vpop.f32.mrb[0].mxu0
    %1201 = vmatprep.mubr.bf16.mxu0 %v1092
    %1202 = vmatmul.mubr.bf16.gmra.mrb[0].mxu0 %v1091
    %v1203 = vpop.f32.mrb[0].mxu0
    %v1204 = vadd.f32 %v1055, %v1203
    %v1205 = vpop.f32.mrb[0].mxu0
    %v1206 = vpop.f32.mrb[0].mxu0
    %v1207 = vadd.f32 %v1056, %v1206
    %v1208 = vpop.f32.mrb[0].mxu0
    %1209 = vmatprep.mubr.bf16.mxu0 %v1094
    %1210 = vmatmul.mubr.bf16.gmra.mrb[0].mxu0 %v1093
    %v1211 = vpop.f32.mrb[0].mxu0
    %v1212 = vadd.f32 %v1057, %v1211
    %v1213 = vpop.f32.mrb[0].mxu0
    %v1214 = vpop.f32.mrb[0].mxu0
    %v1215 = vadd.f32 %v1058, %v1214
    %v1216 = vpop.f32.mrb[0].mxu0
    %1217 = vmatprep.mubr.bf16.mxu0 %v1096
    %1218 = vmatmul.mubr.bf16.gmra.mrb[0].mxu0 %v1095
    %v1219 = vpop.f32.mrb[0].mxu0
    %v1220 = vadd.f32 %v1059, %v1219
    %v1221 = vpop.f32.mrb[0].mxu0
    %v1222 = vpop.f32.mrb[0].mxu0
    %v1223 = vadd.f32 %v1060, %v1222
    %v1224 = vpop.f32.mrb[0].mxu0
    %1225 = vmatprep.mubr.bf16.mxu0 %v1098
    %1226 = vmatmul.mubr.bf16.gmra.mrb[0].mxu0 %v1097
    %v1227 = vpop.f32.mrb[0].mxu0
    %v1228 = vadd.f32 %v1061, %v1227
    %v1229 = vpop.f32.mrb[0].mxu0
    %v1230 = vpop.f32.mrb[0].mxu0
    %v1231 = vadd.f32 %v1062, %v1230
    %v1232 = vpop.f32.mrb[0].mxu0
    %1233 = vmatprep.mubr.bf16.mxu0 %v1100
    %1234 = vmatmul.mubr.bf16.gmra.mrb[0].mxu0 %v1099
    %v1235 = vpop.f32.mrb[0].mxu0
    %v1236 = vadd.f32 %v1063, %v1235
    %v1237 = vpop.f32.mrb[0].mxu0
    %v1238 = vpop.f32.mrb[0].mxu0
    %v1239 = vadd.f32 %v1064, %v1238
    %v1240 = vpop.f32.mrb[0].mxu0
    %1241 = vmatprep.mubr.bf16.mxu0 %v1102
    %1242 = vmatmul.mubr.bf16.gmra.mrb[0].mxu0 %v1101
    %v1243 = vpop.f32.mrb[0].mxu0
    %v1244 = vadd.f32 %v1065, %v1243
    %v1245 = vpop.f32.mrb[0].mxu0
    %v1246 = vpop.f32.mrb[0].mxu0
    %v1247 = vadd.f32 %v1066, %v1246
    %v1248 = vpop.f32.mrb[0].mxu0
    %1249 = vmatprep.mubr.bf16.mxu0 %v1104
    %1250 = vmatmul.mubr.bf16.gmra.mrb[0].mxu0 %v1103
    %v1251 = vpop.f32.mrb[0].mxu0
    %v1252 = vadd.f32 %v1067, %v1251
    %v1253 = vpop.f32.mrb[0].mxu0
    %v1254 = vpop.f32.mrb[0].mxu0
    %v1255 = vadd.f32 %v1068, %v1254
    %v1256 = vpop.f32.mrb[0].mxu0
    %1257 = vmatprep.mubr.bf16.mxu0 %v1106
    %1258 = vmatmul.mubr.bf16.gmra.mrb[0].mxu0 %v1105
    %v1259 = vpop.f32.mrb[0].mxu0
    %v1260 = vadd.f32 %v1069, %v1259
    %v1261 = vpop.f32.mrb[0].mxu0
    %v1262 = vpop.f32.mrb[0].mxu0
    %v1263 = vadd.f32 %v1070, %v1262
    %v1264 = vpop.f32.mrb[0].mxu0
    %1265 = vmatprep.mubr.bf16.mxu0 %v1108
    %1266 = vmatmul.mubr.bf16.gmra.mrb[0].mxu0 %v1107
    %v1267 = vpop.f32.mrb[0].mxu0
    %v1268 = vadd.f32 %v1071, %v1267
    %v1269 = vpop.f32.mrb[0].mxu0
    %v1270 = vpop.f32.mrb[0].mxu0
    %v1271 = vadd.f32 %v1072, %v1270
    %v1272 = vpop.f32.mrb[0].mxu0
    %1273 = vmatprep.mubr.bf16.mxu0 %v1110
    %1274 = vmatmul.mubr.bf16.gmra.mrb[0].mxu0 %v1109
    %v1275 = vpop.f32.mrb[0].mxu0
    %v1276 = vadd.f32 %v1073, %v1275
    %v1277 = vpop.f32.mrb[0].mxu0
    %v1278 = vpop.f32.mrb[0].mxu0
    %v1279 = vadd.f32 %v1074, %v1278
    %v1280 = vpop.f32.mrb[0].mxu0
    %1281 = vmatprep.mubr.bf16.mxu0 %v1112
    %1282 = vmatmul.mubr.bf16.gmra.mrb[0].mxu0 %v1111
    %v1283 = vpop.f32.mrb[0].mxu0
    %v1284 = vadd.f32 %v1075, %v1283
    %v1285 = vpop.f32.mrb[0].mxu0
    %v1286 = vpop.f32.mrb[0].mxu0
    %v1287 = vadd.f32 %v1076, %v1286
    %v1288 = vpop.f32.mrb[0].mxu0
    %1289 = vdwg.mxu0
    %v1290 = vpack.c.bf16 %v1167, %v1164
    %v1291 = vpack.c.bf16 %v1175, %v1172
    %v1292 = vpack.c.bf16 %v1183, %v1180
    %v1293 = vpack.c.bf16 %v1191, %v1188
    %v1294 = vpack.c.bf16 %v1199, %v1196
    %v1295 = vpack.c.bf16 %v1207, %v1204
    %v1296 = vpack.c.bf16 %v1215, %v1212
    %v1297 = vpack.c.bf16 %v1223, %v1220
    %v1298 = vpack.c.bf16 %v1231, %v1228
    %v1299 = vpack.c.bf16 %v1239, %v1236
    %v1300 = vpack.c.bf16 %v1247, %v1244
    %v1301 = vpack.c.bf16 %v1255, %v1252
    %v1302 = vpack.c.bf16 %v1263, %v1260
    %v1303 = vpack.c.bf16 %v1271, %v1268
    %v1304 = vpack.c.bf16 %v1279, %v1276
    %v1305 = vpack.c.bf16 %v1287, %v1284
    %1306 = vmatprep.subr.bf16.mxu0 0
    %1307 = vmatpush1.bf16.msra.mxu0 %v1290
    %1308 = vmatprep.subr.bf16.mxu0 0
    %1309 = vmatpush1.bf16.msra.mxu0 %v1291
    %1310 = vmatprep.subr.bf16.mxu0 0
    %1311 = vmatpush1.bf16.msra.mxu0 %v1292
    %1312 = vmatprep.subr.bf16.mxu0 0
    %1313 = vmatpush1.bf16.msra.mxu0 %v1293
    %1314 = vmatprep.subr.bf16.mxu0 0
    %1315 = vmatpush1.bf16.msra.mxu0 %v1294
    %1316 = vmatprep.subr.bf16.mxu0 0
    %1317 = vmatpush1.bf16.msra.mxu0 %v1295
    %1318 = vmatprep.subr.bf16.mxu0 0
    %1319 = vmatpush1.bf16.msra.mxu0 %v1296
    %1320 = vmatprep.subr.bf16.mxu0 0
    %1321 = vmatpush1.bf16.msra.mxu0 %v1297
    %1322 = vmatprep.subr.bf16.mxu0 0
    %1323 = vmatpush1.bf16.msra.mxu0 %v1298
    %1324 = vmatprep.subr.bf16.mxu0 0
    %1325 = vmatpush1.bf16.msra.mxu0 %v1299
    %1326 = vmatprep.subr.bf16.mxu0 0
    %1327 = vmatpush1.bf16.msra.mxu0 %v1300
    %1328 = vmatprep.subr.bf16.mxu0 0
    %1329 = vmatpush1.bf16.msra.mxu0 %v1301
    %1330 = vmatprep.subr.bf16.mxu0 0
    %1331 = vmatpush1.bf16.msra.mxu0 %v1302
    %1332 = vmatprep.subr.bf16.mxu0 0
    %1333 = vmatpush1.bf16.msra.mxu0 %v1303
    %1334 = vmatprep.subr.bf16.mxu0 0
    %1335 = vmatpush1.bf16.msra.mxu0 %v1304
    %1336 = vmatprep.subr.bf16.mxu0 0
    %1337 = vmatpush1.bf16.msra.mxu0 %v1305
    %1338 = vmatprep.mubr.bf16.mxu0 %v1082
    %1339 = vmatmul.mubr.bf16.gmra.mrb[0].mxu0 %v1081
    %v1340 = vpop.f32.mrb[0].mxu0
    %v1341 = vadd.f32 %v1045, %v1340
    %v1342 = vpop.f32.mrb[0].mxu0
    %v1343 = vpop.f32.mrb[0].mxu0
    %v1344 = vadd.f32 %v1046, %v1343
    %v1345 = vpop.f32.mrb[0].mxu0
    %1346 = vmatprep.mubr.bf16.mxu0 %v1084
    %1347 = vmatmul.mubr.bf16.gmra.mrb[0].mxu0 %v1083
    %v1348 = vpop.f32.mrb[0].mxu0
    %v1349 = vadd.f32 %v1047, %v1348
    %v1350 = vpop.f32.mrb[0].mxu0
    %v1351 = vpop.f32.mrb[0].mxu0
    %v1352 = vadd.f32 %v1048, %v1351
    %v1353 = vpop.f32.mrb[0].mxu0
    %1354 = vmatprep.mubr.bf16.mxu0 %v1086
    %1355 = vmatmul.mubr.bf16.gmra.mrb[0].mxu0 %v1085
    %v1356 = vpop.f32.mrb[0].mxu0
    %v1357 = vadd.f32 %v1049, %v1356
    %v1358 = vpop.f32.mrb[0].mxu0
    %v1359 = vpop.f32.mrb[0].mxu0
    %v1360 = vadd.f32 %v1050, %v1359
    %v1361 = vpop.f32.mrb[0].mxu0
    %1362 = vmatprep.mubr.bf16.mxu0 %v1088
    %1363 = vmatmul.mubr.bf16.gmra.mrb[0].mxu0 %v1087
    %v1364 = vpop.f32.mrb[0].mxu0
    %v1365 = vadd.f32 %v1051, %v1364
    %v1366 = vpop.f32.mrb[0].mxu0
    %v1367 = vpop.f32.mrb[0].mxu0
    %v1368 = vadd.f32 %v1052, %v1367
    %v1369 = vpop.f32.mrb[0].mxu0
    %1370 = vmatprep.mubr.bf16.mxu0 %v1090
    %1371 = vmatmul.mubr.bf16.gmra.mrb[0].mxu0 %v1089
    %v1372 = vpop.f32.mrb[0].mxu0
    %v1373 = vadd.f32 %v1053, %v1372
    %v1374 = vpop.f32.mrb[0].mxu0
    %v1375 = vpop.f32.mrb[0].mxu0
    %v1376 = vadd.f32 %v1054, %v1375
    %v1377 = vpop.f32.mrb[0].mxu0
    %1378 = vmatprep.mubr.bf16.mxu0 %v1092
    %1379 = vmatmul.mubr.bf16.gmra.mrb[0].mxu0 %v1091
    %v1380 = vpop.f32.mrb[0].mxu0
    %v1381 = vadd.f32 %v1055, %v1380
    %v1382 = vpop.f32.mrb[0].mxu0
    %v1383 = vpop.f32.mrb[0].mxu0
    %v1384 = vadd.f32 %v1056, %v1383
    %v1385 = vpop.f32.mrb[0].mxu0
    %1386 = vmatprep.mubr.bf16.mxu0 %v1094
    %1387 = vmatmul.mubr.bf16.gmra.mrb[0].mxu0 %v1093
    %v1388 = vpop.f32.mrb[0].mxu0
    %v1389 = vadd.f32 %v1057, %v1388
    %v1390 = vpop.f32.mrb[0].mxu0
    %v1391 = vpop.f32.mrb[0].mxu0
    %v1392 = vadd.f32 %v1058, %v1391
    %v1393 = vpop.f32.mrb[0].mxu0
    %1394 = vmatprep.mubr.bf16.mxu0 %v1096
    %1395 = vmatmul.mubr.bf16.gmra.mrb[0].mxu0 %v1095
    %v1396 = vpop.f32.mrb[0].mxu0
    %v1397 = vadd.f32 %v1059, %v1396
    %v1398 = vpop.f32.mrb[0].mxu0
    %v1399 = vpop.f32.mrb[0].mxu0
    %v1400 = vadd.f32 %v1060, %v1399
    %v1401 = vpop.f32.mrb[0].mxu0
    %1402 = vmatprep.mubr.bf16.mxu0 %v1098
    %1403 = vmatmul.mubr.bf16.gmra.mrb[0].mxu0 %v1097
    %v1404 = vpop.f32.mrb[0].mxu0
    %v1405 = vadd.f32 %v1061, %v1404
    %v1406 = vpop.f32.mrb[0].mxu0
    %v1407 = vpop.f32.mrb[0].mxu0
    %v1408 = vadd.f32 %v1062, %v1407
    %v1409 = vpop.f32.mrb[0].mxu0
    %1410 = vmatprep.mubr.bf16.mxu0 %v1100
    %1411 = vmatmul.mubr.bf16.gmra.mrb[0].mxu0 %v1099
    %v1412 = vpop.f32.mrb[0].mxu0
    %v1413 = vadd.f32 %v1063, %v1412
    %v1414 = vpop.f32.mrb[0].mxu0
    %v1415 = vpop.f32.mrb[0].mxu0
    %v1416 = vadd.f32 %v1064, %v1415
    %v1417 = vpop.f32.mrb[0].mxu0
    %1418 = vmatprep.mubr.bf16.mxu0 %v1102
    %1419 = vmatmul.mubr.bf16.gmra.mrb[0].mxu0 %v1101
    %v1420 = vpop.f32.mrb[0].mxu0
    %v1421 = vadd.f32 %v1065, %v1420
    %v1422 = vpop.f32.mrb[0].mxu0
    %v1423 = vpop.f32.mrb[0].mxu0
    %v1424 = vadd.f32 %v1066, %v1423
    %v1425 = vpop.f32.mrb[0].mxu0
    %1426 = vmatprep.mubr.bf16.mxu0 %v1104
    %1427 = vmatmul.mubr.bf16.gmra.mrb[0].mxu0 %v1103
    %v1428 = vpop.f32.mrb[0].mxu0
    %v1429 = vadd.f32 %v1067, %v1428
    %v1430 = vpop.f32.mrb[0].mxu0
    %v1431 = vpop.f32.mrb[0].mxu0
    %v1432 = vadd.f32 %v1068, %v1431
    %v1433 = vpop.f32.mrb[0].mxu0
    %1434 = vmatprep.mubr.bf16.mxu0 %v1106
    %1435 = vmatmul.mubr.bf16.gmra.mrb[0].mxu0 %v1105
    %v1436 = vpop.f32.mrb[0].mxu0
    %v1437 = vadd.f32 %v1069, %v1436
    %v1438 = vpop.f32.mrb[0].mxu0
    %v1439 = vpop.f32.mrb[0].mxu0
    %v1440 = vadd.f32 %v1070, %v1439
    %v1441 = vpop.f32.mrb[0].mxu0
    %1442 = vmatprep.mubr.bf16.mxu0 %v1108
    %1443 = vmatmul.mubr.bf16.gmra.mrb[0].mxu0 %v1107
    %v1444 = vpop.f32.mrb[0].mxu0
    %v1445 = vadd.f32 %v1071, %v1444
    %v1446 = vpop.f32.mrb[0].mxu0
    %v1447 = vpop.f32.mrb[0].mxu0
    %v1448 = vadd.f32 %v1072, %v1447
    %v1449 = vpop.f32.mrb[0].mxu0
    %1450 = vmatprep.mubr.bf16.mxu0 %v1110
    %1451 = vmatmul.mubr.bf16.gmra.mrb[0].mxu0 %v1109
    %v1452 = vpop.f32.mrb[0].mxu0
    %v1453 = vadd.f32 %v1073, %v1452
    %v1454 = vpop.f32.mrb[0].mxu0
    %v1455 = vpop.f32.mrb[0].mxu0
    %v1456 = vadd.f32 %v1074, %v1455
    %v1457 = vpop.f32.mrb[0].mxu0
    %1458 = vmatprep.mubr.bf16.mxu0 %v1112
    %1459 = vmatmul.mubr.bf16.gmra.mrb[0].mxu0 %v1111
    %v1460 = vpop.f32.mrb[0].mxu0
    %v1461 = vadd.f32 %v1075, %v1460
    %v1462 = vpop.f32.mrb[0].mxu0
    %v1463 = vpop.f32.mrb[0].mxu0
    %v1464 = vadd.f32 %v1076, %v1463
    %v1465 = vpop.f32.mrb[0].mxu0
    %1466 = vdwg.mxu0
    %v1467 = vpack.c.bf16 %v1344, %v1341
    %v1468 = vpack.c.bf16 %v1352, %v1349
    %v1469 = vpack.c.bf16 %v1360, %v1357
    %v1470 = vpack.c.bf16 %v1368, %v1365
    %v1471 = vpack.c.bf16 %v1376, %v1373
    %v1472 = vpack.c.bf16 %v1384, %v1381
    %v1473 = vpack.c.bf16 %v1392, %v1389
    %v1474 = vpack.c.bf16 %v1400, %v1397
    %v1475 = vpack.c.bf16 %v1408, %v1405
    %v1476 = vpack.c.bf16 %v1416, %v1413
    %v1477 = vpack.c.bf16 %v1424, %v1421
    %v1478 = vpack.c.bf16 %v1432, %v1429
    %v1479 = vpack.c.bf16 %v1440, %v1437
    %v1480 = vpack.c.bf16 %v1448, %v1445
    %v1481 = vpack.c.bf16 %v1456, %v1453
    %v1482 = vpack.c.bf16 %v1464, %v1461
    %1483 = vmatprep.subr.bf16.mxu0 0
    %1484 = vmatpush1.bf16.msra.mxu0 %v1467
    %1485 = vmatprep.subr.bf16.mxu0 0
    %1486 = vmatpush1.bf16.msra.mxu0 %v1468
    %1487 = vmatprep.subr.bf16.mxu0 0
    %1488 = vmatpush1.bf16.msra.mxu0 %v1469
    %1489 = vmatprep.subr.bf16.mxu0 0
    %1490 = vmatpush1.bf16.msra.mxu0 %v1470
    %1491 = vmatprep.subr.bf16.mxu0 0
    %1492 = vmatpush1.bf16.msra.mxu0 %v1471
    %1493 = vmatprep.subr.bf16.mxu0 0
    %1494 = vmatpush1.bf16.msra.mxu0 %v1472
    %1495 = vmatprep.subr.bf16.mxu0 0
    %1496 = vmatpush1.bf16.msra.mxu0 %v1473
    %1497 = vmatprep.subr.bf16.mxu0 0
    %1498 = vmatpush1.bf16.msra.mxu0 %v1474
    %1499 = vmatprep.subr.bf16.mxu0 0
    %1500 = vmatpush1.bf16.msra.mxu0 %v1475
    %1501 = vmatprep.subr.bf16.mxu0 0
    %1502 = vmatpush1.bf16.msra.mxu0 %v1476
    %1503 = vmatprep.subr.bf16.mxu0 0
    %1504 = vmatpush1.bf16.msra.mxu0 %v1477
    %1505 = vmatprep.subr.bf16.mxu0 0
    %1506 = vmatpush1.bf16.msra.mxu0 %v1478
    %1507 = vmatprep.subr.bf16.mxu0 0
    %1508 = vmatpush1.bf16.msra.mxu0 %v1479
    %1509 = vmatprep.subr.bf16.mxu0 0
    %1510 = vmatpush1.bf16.msra.mxu0 %v1480
    %1511 = vmatprep.subr.bf16.mxu0 0
    %1512 = vmatpush1.bf16.msra.mxu0 %v1481
    %1513 = vmatprep.subr.bf16.mxu0 0
    %1514 = vmatpush1.bf16.msra.mxu0 %v1482
    %1515 = vmatprep.mubr.bf16.mxu0 %v1082
    %1516 = vmatmul.mubr.bf16.gmra.mrb[0].mxu0 %v1081
    %v1517 = vpop.f32.mrb[0].mxu0
    %v1518 = vadd.f32 %v1045, %v1517
    %v1519 = vpop.f32.mrb[0].mxu0
    %v1520 = vpop.f32.mrb[0].mxu0
    %v1521 = vadd.f32 %v1046, %v1520
    %v1522 = vpop.f32.mrb[0].mxu0
    %1523 = vmatprep.mubr.bf16.mxu0 %v1084
    %1524 = vmatmul.mubr.bf16.gmra.mrb[0].mxu0 %v1083
    %v1525 = vpop.f32.mrb[0].mxu0
    %v1526 = vadd.f32 %v1047, %v1525
    %v1527 = vpop.f32.mrb[0].mxu0
    %v1528 = vpop.f32.mrb[0].mxu0
    %v1529 = vadd.f32 %v1048, %v1528
    %v1530 = vpop.f32.mrb[0].mxu0
    %1531 = vmatprep.mubr.bf16.mxu0 %v1086
    %1532 = vmatmul.mubr.bf16.gmra.mrb[0].mxu0 %v1085
    %v1533 = vpop.f32.mrb[0].mxu0
    %v1534 = vadd.f32 %v1049, %v1533
    %v1535 = vpop.f32.mrb[0].mxu0
    %v1536 = vpop.f32.mrb[0].mxu0
    %v1537 = vadd.f32 %v1050, %v1536
    %v1538 = vpop.f32.mrb[0].mxu0
    %1539 = vmatprep.mubr.bf16.mxu0 %v1088
    %1540 = vmatmul.mubr.bf16.gmra.mrb[0].mxu0 %v1087
    %v1541 = vpop.f32.mrb[0].mxu0
    %v1542 = vadd.f32 %v1051, %v1541
    %v1543 = vpop.f32.mrb[0].mxu0
    %v1544 = vpop.f32.mrb[0].mxu0
    %v1545 = vadd.f32 %v1052, %v1544
    %v1546 = vpop.f32.mrb[0].mxu0
    %1547 = vmatprep.mubr.bf16.mxu0 %v1090
    %1548 = vmatmul.mubr.bf16.gmra.mrb[0].mxu0 %v1089
    %v1549 = vpop.f32.mrb[0].mxu0
    %v1550 = vadd.f32 %v1053, %v1549
    %v1551 = vpop.f32.mrb[0].mxu0
    %v1552 = vpop.f32.mrb[0].mxu0
    %v1553 = vadd.f32 %v1054, %v1552
    %v1554 = vpop.f32.mrb[0].mxu0
    %1555 = vmatprep.mubr.bf16.mxu0 %v1092
    %1556 = vmatmul.mubr.bf16.gmra.mrb[0].mxu0 %v1091
    %v1557 = vpop.f32.mrb[0].mxu0
    %v1558 = vadd.f32 %v1055, %v1557
    %v1559 = vpop.f32.mrb[0].mxu0
    %v1560 = vpop.f32.mrb[0].mxu0
    %v1561 = vadd.f32 %v1056, %v1560
    %v1562 = vpop.f32.mrb[0].mxu0
    %1563 = vmatprep.mubr.bf16.mxu0 %v1094
    %1564 = vmatmul.mubr.bf16.gmra.mrb[0].mxu0 %v1093
    %v1565 = vpop.f32.mrb[0].mxu0
    %v1566 = vadd.f32 %v1057, %v1565
    %v1567 = vpop.f32.mrb[0].mxu0
    %v1568 = vpop.f32.mrb[0].mxu0
    %v1569 = vadd.f32 %v1058, %v1568
    %v1570 = vpop.f32.mrb[0].mxu0
    %1571 = vmatprep.mubr.bf16.mxu0 %v1096
    %1572 = vmatmul.mubr.bf16.gmra.mrb[0].mxu0 %v1095
    %v1573 = vpop.f32.mrb[0].mxu0
    %v1574 = vadd.f32 %v1059, %v1573
    %v1575 = vpop.f32.mrb[0].mxu0
    %v1576 = vpop.f32.mrb[0].mxu0
    %v1577 = vadd.f32 %v1060, %v1576
    %v1578 = vpop.f32.mrb[0].mxu0
    %1579 = vmatprep.mubr.bf16.mxu0 %v1098
    %1580 = vmatmul.mubr.bf16.gmra.mrb[0].mxu0 %v1097
    %v1581 = vpop.f32.mrb[0].mxu0
    %v1582 = vadd.f32 %v1061, %v1581
    %v1583 = vpop.f32.mrb[0].mxu0
    %v1584 = vpop.f32.mrb[0].mxu0
    %v1585 = vadd.f32 %v1062, %v1584
    %v1586 = vpop.f32.mrb[0].mxu0
    %1587 = vmatprep.mubr.bf16.mxu0 %v1100
    %1588 = vmatmul.mubr.bf16.gmra.mrb[0].mxu0 %v1099
    %v1589 = vpop.f32.mrb[0].mxu0
    %v1590 = vadd.f32 %v1063, %v1589
    %v1591 = vpop.f32.mrb[0].mxu0
    %v1592 = vpop.f32.mrb[0].mxu0
    %v1593 = vadd.f32 %v1064, %v1592
    %v1594 = vpop.f32.mrb[0].mxu0
    %1595 = vmatprep.mubr.bf16.mxu0 %v1102
    %1596 = vmatmul.mubr.bf16.gmra.mrb[0].mxu0 %v1101
    %v1597 = vpop.f32.mrb[0].mxu0
    %v1598 = vadd.f32 %v1065, %v1597
    %v1599 = vpop.f32.mrb[0].mxu0
    %v1600 = vpop.f32.mrb[0].mxu0
    %v1601 = vadd.f32 %v1066, %v1600
    %v1602 = vpop.f32.mrb[0].mxu0
    %1603 = vmatprep.mubr.bf16.mxu0 %v1104
    %1604 = vmatmul.mubr.bf16.gmra.mrb[0].mxu0 %v1103
    %v1605 = vpop.f32.mrb[0].mxu0
    %v1606 = vadd.f32 %v1067, %v1605
    %v1607 = vpop.f32.mrb[0].mxu0
    %v1608 = vpop.f32.mrb[0].mxu0
    %v1609 = vadd.f32 %v1068, %v1608
    %v1610 = vpop.f32.mrb[0].mxu0
    %1611 = vmatprep.mubr.bf16.mxu0 %v1106
    %1612 = vmatmul.mubr.bf16.gmra.mrb[0].mxu0 %v1105
    %v1613 = vpop.f32.mrb[0].mxu0
    %v1614 = vadd.f32 %v1069, %v1613
    %v1615 = vpop.f32.mrb[0].mxu0
    %v1616 = vpop.f32.mrb[0].mxu0
    %v1617 = vadd.f32 %v1070, %v1616
    %v1618 = vpop.f32.mrb[0].mxu0
    %1619 = vmatprep.mubr.bf16.mxu0 %v1108
    %1620 = vmatmul.mubr.bf16.gmra.mrb[0].mxu0 %v1107
    %v1621 = vpop.f32.mrb[0].mxu0
    %v1622 = vadd.f32 %v1071, %v1621
    %v1623 = vpop.f32.mrb[0].mxu0
    %v1624 = vpop.f32.mrb[0].mxu0
    %v1625 = vadd.f32 %v1072, %v1624
    %v1626 = vpop.f32.mrb[0].mxu0
    %1627 = vmatprep.mubr.bf16.mxu0 %v1110
    %1628 = vmatmul.mubr.bf16.gmra.mrb[0].mxu0 %v1109
    %v1629 = vpop.f32.mrb[0].mxu0
    %v1630 = vadd.f32 %v1073, %v1629
    %v1631 = vpop.f32.mrb[0].mxu0
    %v1632 = vpop.f32.mrb[0].mxu0
    %v1633 = vadd.f32 %v1074, %v1632
    %v1634 = vpop.f32.mrb[0].mxu0
    %1635 = vmatprep.mubr.bf16.mxu0 %v1112
    %1636 = vmatmul.mubr.bf16.gmra.mrb[0].mxu0 %v1111
    %v1637 = vpop.f32.mrb[0].mxu0
    %v1638 = vadd.f32 %v1075, %v1637
    %v1639 = vpop.f32.mrb[0].mxu0
    %v1640 = vpop.f32.mrb[0].mxu0
    %v1641 = vadd.f32 %v1076, %v1640
    %v1642 = vpop.f32.mrb[0].mxu0
    %1643 = vdwg.mxu0
    %v1644 = vpack.c.bf16 %v1521, %v1518
    %v1645 = vpack.c.bf16 %v1529, %v1526
    %v1646 = vpack.c.bf16 %v1537, %v1534
    %v1647 = vpack.c.bf16 %v1545, %v1542
    %v1648 = vpack.c.bf16 %v1553, %v1550
    %v1649 = vpack.c.bf16 %v1561, %v1558
    %v1650 = vpack.c.bf16 %v1569, %v1566
    %v1651 = vpack.c.bf16 %v1577, %v1574
    %v1652 = vpack.c.bf16 %v1585, %v1582
    %v1653 = vpack.c.bf16 %v1593, %v1590
    %v1654 = vpack.c.bf16 %v1601, %v1598
    %v1655 = vpack.c.bf16 %v1609, %v1606
    %v1656 = vpack.c.bf16 %v1617, %v1614
    %v1657 = vpack.c.bf16 %v1625, %v1622
    %v1658 = vpack.c.bf16 %v1633, %v1630
    %v1659 = vpack.c.bf16 %v1641, %v1638
    %1660 = vmatprep.subr.bf16.mxu0 0
    %1661 = vmatpush1.bf16.msra.mxu0 %v1644
    %1662 = vmatprep.subr.bf16.mxu0 0
    %1663 = vmatpush1.bf16.msra.mxu0 %v1645
    %1664 = vmatprep.subr.bf16.mxu0 0
    %1665 = vmatpush1.bf16.msra.mxu0 %v1646
    %1666 = vmatprep.subr.bf16.mxu0 0
    %1667 = vmatpush1.bf16.msra.mxu0 %v1647
    %1668 = vmatprep.subr.bf16.mxu0 0
    %1669 = vmatpush1.bf16.msra.mxu0 %v1648
    %1670 = vmatprep.subr.bf16.mxu0 0
    %1671 = vmatpush1.bf16.msra.mxu0 %v1649
    %1672 = vmatprep.subr.bf16.mxu0 0
    %1673 = vmatpush1.bf16.msra.mxu0 %v1650
    %1674 = vmatprep.subr.bf16.mxu0 0
    %1675 = vmatpush1.bf16.msra.mxu0 %v1651
    %1676 = vmatprep.subr.bf16.mxu0 0
    %1677 = vmatpush1.bf16.msra.mxu0 %v1652
    %1678 = vmatprep.subr.bf16.mxu0 0
    %1679 = vmatpush1.bf16.msra.mxu0 %v1653
    %1680 = vmatprep.subr.bf16.mxu0 0
    %1681 = vmatpush1.bf16.msra.mxu0 %v1654
    %1682 = vmatprep.subr.bf16.mxu0 0
    %1683 = vmatpush1.bf16.msra.mxu0 %v1655
    %1684 = vmatprep.subr.bf16.mxu0 0
    %1685 = vmatpush1.bf16.msra.mxu0 %v1656
    %1686 = vmatprep.subr.bf16.mxu0 0
    %1687 = vmatpush1.bf16.msra.mxu0 %v1657
    %1688 = vmatprep.subr.bf16.mxu0 0
    %1689 = vmatpush1.bf16.msra.mxu0 %v1658
    %1690 = vmatprep.subr.bf16.mxu0 0
    %1691 = vmatpush1.bf16.msra.mxu0 %v1659
    %1692 = vmatprep.mubr.bf16.mxu0 %v1082
    %1693 = vmatmul.mubr.bf16.gmra.mrb[0].mxu0 %v1081
    %v1694 = vpop.f32.mrb[0].mxu0
    %v1695 = vadd.f32 %v1045, %v1694
    %v1696 = vpop.f32.mrb[0].mxu0
    %v1697 = vpop.f32.mrb[0].mxu0
    %v1698 = vadd.f32 %v1046, %v1697
    %v1699 = vpop.f32.mrb[0].mxu0
    %1700 = vmatprep.mubr.bf16.mxu0 %v1084
    %1701 = vmatmul.mubr.bf16.gmra.mrb[0].mxu0 %v1083
    %v1702 = vpop.f32.mrb[0].mxu0
    %v1703 = vadd.f32 %v1047, %v1702
    %v1704 = vpop.f32.mrb[0].mxu0
    %v1705 = vpop.f32.mrb[0].mxu0
    %v1706 = vadd.f32 %v1048, %v1705
    %v1707 = vpop.f32.mrb[0].mxu0
    %1708 = vmatprep.mubr.bf16.mxu0 %v1086
    %1709 = vmatmul.mubr.bf16.gmra.mrb[0].mxu0 %v1085
    %v1710 = vpop.f32.mrb[0].mxu0
    %v1711 = vadd.f32 %v1049, %v1710
    %v1712 = vpop.f32.mrb[0].mxu0
    %v1713 = vpop.f32.mrb[0].mxu0
    %v1714 = vadd.f32 %v1050, %v1713
    %v1715 = vpop.f32.mrb[0].mxu0
    %1716 = vmatprep.mubr.bf16.mxu0 %v1088
    %1717 = vmatmul.mubr.bf16.gmra.mrb[0].mxu0 %v1087
    %v1718 = vpop.f32.mrb[0].mxu0
    %v1719 = vadd.f32 %v1051, %v1718
    %v1720 = vpop.f32.mrb[0].mxu0
    %v1721 = vpop.f32.mrb[0].mxu0
    %v1722 = vadd.f32 %v1052, %v1721
    %v1723 = vpop.f32.mrb[0].mxu0
    %1724 = vmatprep.mubr.bf16.mxu0 %v1090
    %1725 = vmatmul.mubr.bf16.gmra.mrb[0].mxu0 %v1089
    %v1726 = vpop.f32.mrb[0].mxu0
    %v1727 = vadd.f32 %v1053, %v1726
    %v1728 = vpop.f32.mrb[0].mxu0
    %v1729 = vpop.f32.mrb[0].mxu0
    %v1730 = vadd.f32 %v1054, %v1729
    %v1731 = vpop.f32.mrb[0].mxu0
    %1732 = vmatprep.mubr.bf16.mxu0 %v1092
    %1733 = vmatmul.mubr.bf16.gmra.mrb[0].mxu0 %v1091
    %v1734 = vpop.f32.mrb[0].mxu0
    %v1735 = vadd.f32 %v1055, %v1734
    %v1736 = vpop.f32.mrb[0].mxu0
    %v1737 = vpop.f32.mrb[0].mxu0
    %v1738 = vadd.f32 %v1056, %v1737
    %v1739 = vpop.f32.mrb[0].mxu0
    %1740 = vmatprep.mubr.bf16.mxu0 %v1094
    %1741 = vmatmul.mubr.bf16.gmra.mrb[0].mxu0 %v1093
    %v1742 = vpop.f32.mrb[0].mxu0
    %v1743 = vadd.f32 %v1057, %v1742
    %v1744 = vpop.f32.mrb[0].mxu0
    %v1745 = vpop.f32.mrb[0].mxu0
    %v1746 = vadd.f32 %v1058, %v1745
    %v1747 = vpop.f32.mrb[0].mxu0
    %1748 = vmatprep.mubr.bf16.mxu0 %v1096
    %1749 = vmatmul.mubr.bf16.gmra.mrb[0].mxu0 %v1095
    %v1750 = vpop.f32.mrb[0].mxu0
    %v1751 = vadd.f32 %v1059, %v1750
    %v1752 = vpop.f32.mrb[0].mxu0
    %v1753 = vpop.f32.mrb[0].mxu0
    %v1754 = vadd.f32 %v1060, %v1753
    %v1755 = vpop.f32.mrb[0].mxu0
    %1756 = vmatprep.mubr.bf16.mxu0 %v1098
    %1757 = vmatmul.mubr.bf16.gmra.mrb[0].mxu0 %v1097
    %v1758 = vpop.f32.mrb[0].mxu0
    %v1759 = vadd.f32 %v1061, %v1758
    %v1760 = vpop.f32.mrb[0].mxu0
    %v1761 = vpop.f32.mrb[0].mxu0
    %v1762 = vadd.f32 %v1062, %v1761
    %v1763 = vpop.f32.mrb[0].mxu0
    %1764 = vmatprep.mubr.bf16.mxu0 %v1100
    %1765 = vmatmul.mubr.bf16.gmra.mrb[0].mxu0 %v1099
    %v1766 = vpop.f32.mrb[0].mxu0
    %v1767 = vadd.f32 %v1063, %v1766
    %v1768 = vpop.f32.mrb[0].mxu0
    %v1769 = vpop.f32.mrb[0].mxu0
    %v1770 = vadd.f32 %v1064, %v1769
    %v1771 = vpop.f32.mrb[0].mxu0
    %1772 = vmatprep.mubr.bf16.mxu0 %v1102
    %1773 = vmatmul.mubr.bf16.gmra.mrb[0].mxu0 %v1101
    %v1774 = vpop.f32.mrb[0].mxu0
    %v1775 = vadd.f32 %v1065, %v1774
    %v1776 = vpop.f32.mrb[0].mxu0
    %v1777 = vpop.f32.mrb[0].mxu0
    %v1778 = vadd.f32 %v1066, %v1777
    %v1779 = vpop.f32.mrb[0].mxu0
    %1780 = vmatprep.mubr.bf16.mxu0 %v1104
    %1781 = vmatmul.mubr.bf16.gmra.mrb[0].mxu0 %v1103
    %v1782 = vpop.f32.mrb[0].mxu0
    %v1783 = vadd.f32 %v1067, %v1782
    %v1784 = vpop.f32.mrb[0].mxu0
    %v1785 = vpop.f32.mrb[0].mxu0
    %v1786 = vadd.f32 %v1068, %v1785
    %v1787 = vpop.f32.mrb[0].mxu0
    %1788 = vmatprep.mubr.bf16.mxu0 %v1106
    %1789 = vmatmul.mubr.bf16.gmra.mrb[0].mxu0 %v1105
    %v1790 = vpop.f32.mrb[0].mxu0
    %v1791 = vadd.f32 %v1069, %v1790
    %v1792 = vpop.f32.mrb[0].mxu0
    %v1793 = vpop.f32.mrb[0].mxu0
    %v1794 = vadd.f32 %v1070, %v1793
    %v1795 = vpop.f32.mrb[0].mxu0
    %1796 = vmatprep.mubr.bf16.mxu0 %v1108
    %1797 = vmatmul.mubr.bf16.gmra.mrb[0].mxu0 %v1107
    %v1798 = vpop.f32.mrb[0].mxu0
    %v1799 = vadd.f32 %v1071, %v1798
    %v1800 = vpop.f32.mrb[0].mxu0
    %v1801 = vpop.f32.mrb[0].mxu0
    %v1802 = vadd.f32 %v1072, %v1801
    %v1803 = vpop.f32.mrb[0].mxu0
    %1804 = vmatprep.mubr.bf16.mxu0 %v1110
    %1805 = vmatmul.mubr.bf16.gmra.mrb[0].mxu0 %v1109
    %v1806 = vpop.f32.mrb[0].mxu0
    %v1807 = vadd.f32 %v1073, %v1806
    %v1808 = vpop.f32.mrb[0].mxu0
    %v1809 = vpop.f32.mrb[0].mxu0
    %v1810 = vadd.f32 %v1074, %v1809
    %v1811 = vpop.f32.mrb[0].mxu0
    %1812 = vmatprep.mubr.bf16.mxu0 %v1112
    %1813 = vmatmul.mubr.bf16.gmra.mrb[0].mxu0 %v1111
    %v1814 = vpop.f32.mrb[0].mxu0
    %v1815 = vadd.f32 %v1075, %v1814
    %v1816 = vpop.f32.mrb[0].mxu0
    %v1817 = vpop.f32.mrb[0].mxu0
    %v1818 = vadd.f32 %v1076, %v1817
    %v1819 = vpop.f32.mrb[0].mxu0
    %1820 = vdwg.mxu0
    %1821 = vst [vmem:[#allocation13] sm:$0xff] %v1695
    %1822 = vst [vmem:[#allocation13 + $0x8] sm:$0xff] %v1698
    %1823 = vst [vmem:[#allocation13 + $0x10] sm:$0xff] %v1703
    %1824 = vst [vmem:[#allocation13 + $0x18] sm:$0xff] %v1706
    %1825 = vst [vmem:[#allocation13 + $0x20] sm:$0xff] %v1711
    %1826 = vst [vmem:[#allocation13 + $0x28] sm:$0xff] %v1714
    %1827 = vst [vmem:[#allocation13 + $0x30] sm:$0xff] %v1719
    %1828 = vst [vmem:[#allocation13 + $0x38] sm:$0xff] %v1722
    %1829 = vst [vmem:[#allocation13 + $0x40] sm:$0xff] %v1727
    %1830 = vst [vmem:[#allocation13 + $0x48] sm:$0xff] %v1730
    %1831 = vst [vmem:[#allocation13 + $0x50] sm:$0xff] %v1735
    %1832 = vst [vmem:[#allocation13 + $0x58] sm:$0xff] %v1738
    %1833 = vst [vmem:[#allocation13 + $0x60] sm:$0xff] %v1743
    %1834 = vst [vmem:[#allocation13 + $0x68] sm:$0xff] %v1746
    %1835 = vst [vmem:[#allocation13 + $0x70] sm:$0xff] %v1751
    %1836 = vst [vmem:[#allocation13 + $0x78] sm:$0xff] %v1754
    %1837 = vst [vmem:[#allocation13 + $0x80] sm:$0xff] %v1759
    %1838 = vst [vmem:[#allocation13 + $0x88] sm:$0xff] %v1762
    %1839 = vst [vmem:[#allocation13 + $0x90] sm:$0xff] %v1767
    %1840 = vst [vmem:[#allocation13 + $0x98] sm:$0xff] %v1770
    %1841 = vst [vmem:[#allocation13 + $0xa0] sm:$0xff] %v1775
    %1842 = vst [vmem:[#allocation13 + $0xa8] sm:$0xff] %v1778
    %1843 = vst [vmem:[#allocation13 + $0xb0] sm:$0xff] %v1783
    %1844 = vst [vmem:[#allocation13 + $0xb8] sm:$0xff] %v1786
    %1845 = vst [vmem:[#allocation13 + $0xc0] sm:$0xff] %v1791
    %1846 = vst [vmem:[#allocation13 + $0xc8] sm:$0xff] %v1794
    %1847 = vst [vmem:[#allocation13 + $0xd0] sm:$0xff] %v1799
    %1848 = vst [vmem:[#allocation13 + $0xd8] sm:$0xff] %v1802
    %1849 = vst [vmem:[#allocation13 + $0xe0] sm:$0xff] %v1807
    %1850 = vst [vmem:[#allocation13 + $0xe8] sm:$0xff] %v1810
    %1851 = vst [vmem:[#allocation13 + $0xf0] sm:$0xff] %v1815
    %1852 = vst [vmem:[#allocation13 + $0xf8] sm:$0xff] %v1818
    // Predicated region
    $region50: #{tpu_custom_call.1} parent=1 // pred_check
      _
    $region51: #{tpu_custom_call.1} parent=1 // pred_check_branch
      %1854 = sbr.rel (0) target = $region53
    $region52: #{tpu_custom_call.1} parent=1 // pred_region
      %s1856 = ssub.s32 4096, 4096
      %1857 = vsyncadd [#allocation7], %s1856
      %s1858 = sshll.u32 [#allocation13], 4
      %s1859 = int_to_ptr.vmem [resolvable:$true] %s1858
      %1864 = dma.vmem_to_hbm [thread:$0]  %s1859, 4096, %s9, [#allocation7], 128, 128, 8
    $region53: #{tpu_custom_call.1} parent=1 // pred_fallthru
      _
    // Predicated region
    $region54: #{tpu_custom_call.1} parent=1 // pred_check
      _
    $region55: #{tpu_custom_call.1} parent=1 // pred_check_branch
      %1866 = sbr.rel (0) target = $region57
    $region56: #{tpu_custom_call.1} parent=1 // pred_region
      %1867 = dma.done [#allocation7], 4096
    $region57: #{tpu_custom_call.1} parent=1 // pred_fallthru
      _
    %1868 = vsyncpa [#allocation6], 1
    %1869 = vsyncpa [#allocation9], 1
    %1870 = vsyncpa [#allocation12], 1
    %1871 = vsyncpa [#allocation7], 1
  %1872 = vsyncmov [#allocation3]
  %s1873 = vpop.sfrf %1872
  %p1874 = scmp.eq.s32.totalorder %s1873, 0
  %p1875 = pneg %p1874
  %1877 = shalt.err (%p1875)

</llo_original>
